<compile_context>
chip_gen: v5e
topology: v5e:2x2
jax: 0.10.0
libtpu: 0.0.40
codegen_flags: <defaults>
</compile_context>

<pallas_src>
import functools
import numpy as np

import jax
import jax.numpy as jnp
from jax.experimental import pallas as pl
from jax.experimental.pallas import tpu as pltpu


# ----------------------------------------------------------------------------
# host-side (cached) construction of the dense transform matrices
# ----------------------------------------------------------------------------
@functools.lru_cache(maxsize=None)
def _bilinear_matrix(n_out, n_in):
    """Row-interpolation matrix matching F.interpolate(mode='bilinear',
    align_corners=False) along one axis."""
    A = np.zeros((n_out, n_in), dtype=np.float64)
    scale = n_in / n_out
    for i in range(n_out):
        s = (i + 0.5) * scale - 0.5
        if s < 0.0:
            s = 0.0
        i0 = min(int(np.floor(s)), n_in - 1)
        i1 = min(i0 + 1, n_in - 1)
        frac = s - i0
        A[i, i0] += 1.0 - frac
        A[i, i1] += frac
    return A


@functools.lru_cache(maxsize=None)
def _gaussian_blur_matrix(n, ksize, sigma):
    """1D gaussian blur (reflect padding, as torchvision.gaussian_blur) as a
    dense (n, n) matrix."""
    half = (ksize - 1) * 0.5
    x = np.linspace(-half, half, ksize)
    pdf = np.exp(-0.5 * (x / sigma) ** 2)
    k1d = pdf / pdf.sum()
    r = ksize // 2
    B = np.zeros((n, n), dtype=np.float64)
    for i in range(n):
        for t in range(ksize):
            j = i + t - r
            if j < 0:
                j = -j
            elif j >= n:
                j = 2 * n - 2 - j
            B[i, j] += k1d[t]
    return B


@functools.lru_cache(maxsize=None)
def _dft_shift_blur(n, ksize, sigma):
    """cos/sin DFT matrices with fftshift folded into the output rows and the
    gaussian blur folded into the input side (C' = C @ B, S' = S @ B)."""
    u = np.arange(n)
    ang = 2.0 * np.pi * (np.outer(u, u) % n) / n
    C = np.roll(np.cos(ang), n // 2, axis=0)   # fftshift along output axis
    S = np.roll(np.sin(ang), n // 2, axis=0)
    if ksize and ksize > 0:
        B = _gaussian_blur_matrix(n, int(ksize), float(sigma))
        C = C @ B
        S = S @ B
    return C, S


@functools.lru_cache(maxsize=None)
def _dft_left(n, ksize, sigma):
    """[Ch'; Sh']  (2n, n), bf16 — stacked left DFT operand."""
    C, S = _dft_shift_blur(n, ksize, sigma)
    return jnp.asarray(np.concatenate([C, S], axis=0), jnp.bfloat16)


@functools.lru_cache(maxsize=None)
def _dft_right_t(n, ksize, sigma):
    """[Cw'^T | Sw'^T]  (n, 2n), bf16 — stacked right DFT operand."""
    C, S = _dft_shift_blur(n, ksize, sigma)
    return jnp.asarray(np.concatenate([C.T, S.T], axis=1), jnp.bfloat16)


# ----------------------------------------------------------------------------
# the Pallas kernel (one image per grid step)
# ----------------------------------------------------------------------------
def _augment_kernel(apply_log, normalize, add_noise,
                    x_ref, l_ref, rt_ref, *rest):
    if add_noise:
        noise_ref, csh_ref, cswt_ref, o_ref = rest
    else:
        csh_ref, cswt_ref, o_ref = rest

    f32, bf16 = jnp.float32, jnp.bfloat16
    H, W = o_ref.shape

    # --- bilinear resize with flips / rot90 folded into L / R^T ------------
    # ordering keeps every matmul output lane-dense; the contraction dim is
    # the small (multiple-of-8) padded input size, not 128.
    t = jnp.dot(x_ref[...].astype(bf16), rt_ref[...],
                preferred_element_type=f32)                       # (P, W)
    y = jnp.dot(l_ref[...], t.astype(bf16),
                preferred_element_type=f32)                       # (H, W)

    if add_noise:
        y = y + noise_ref[...]                                    # f32 VPU add

    # --- blur (folded into DFT mats) + fft2 + fftshift + magnitude ---------
    # two stacked 256-wide MXU matmuls (bf16 in, f32 accumulation):
    #   wz   = y @ [Cw'^T | Sw'^T]          (H, 2W)
    #   prod = [Ch' ; Sh'] @ wz             (2H, 2W)
    # quadrants of prod: [[u Cw'^T, u Sw'^T], [v Cw'^T, v Sw'^T]]
    wz = jnp.dot(y.astype(bf16), cswt_ref[...], preferred_element_type=f32)
    prod = jnp.dot(csh_ref[...], wz.astype(bf16), preferred_element_type=f32)

    re = prod[:H, :W] - prod[H:, W:]          # u Cw'^T - v Sw'^T
    im = prod[:H, W:] + prod[H:, :W]          # = -Im(F); sign irrelevant for |F|
    mag = jnp.sqrt(re * re + im * im)

    if apply_log:
        mag = jnp.log1p(mag)
    if normalize:
        n = mag.size
        s = jnp.sum(mag)
        ss = jnp.sum(mag * mag)
        mean = s / n
        var = (ss - n * mean * mean) / (n - 1)    # unbiased, like torch.std()
        mag = (mag - mean) * jax.lax.rsqrt(var)

    o_ref[...] = mag


# ----------------------------------------------------------------------------
# jitted device path: pad + conditional transpose + batched pallas_call
# ----------------------------------------------------------------------------
@functools.partial(jax.jit, static_argnames=("apply_log", "normalize"))
def _augment_device(xb, tflags, L, RT, noise, csh, cswt, *, apply_log, normalize):
    B, Hin, Win = xb.shape
    P = L.shape[-1]
    Ho = L.shape[1]
    Wo = RT.shape[-1]
    add_noise = noise is not None

    # pad to a (P, P) square so the rot90-induced transpose keeps a fixed shape
    xsq = jnp.pad(xb, ((0, 0), (0, P - Hin), (0, P - Win)))
    xsq = jnp.where(tflags[:, None, None], jnp.swapaxes(xsq, 1, 2), xsq)

    per_img = lambda a, b: pl.BlockSpec((None, a, b), lambda i: (i, 0, 0))
    shared = lambda a, b: pl.BlockSpec((a, b), lambda i: (0, 0))

    ins = [xsq, L, RT]
    in_specs = [per_img(P, P), per_img(Ho, P), per_img(P, Wo)]
    if add_noise:
        ins.append(noise)
        in_specs.append(per_img(Ho, Wo))
    ins += [csh, cswt]
    in_specs += [shared(2 * Ho, Ho), shared(Wo, 2 * Wo)]

    return pl.pallas_call(
        functools.partial(_augment_kernel, apply_log, normalize, add_noise),
        grid=(B,),
        out_shape=jax.ShapeDtypeStruct((B, Ho, Wo), jnp.float32),
        in_specs=in_specs,
        out_specs=pl.BlockSpec((None, Ho, Wo), lambda i: (i, 0, 0)),
        compiler_params=pltpu.CompilerParams(
            dimension_semantics=("parallel",)),
    )(*ins)


# ----------------------------------------------------------------------------
# wrapper mirroring TensorAugment.forward (plus an optional batch dim)
# ----------------------------------------------------------------------------
class TensorAugmentPallas:
    def __init__(self, size=(256, 256), p_flip=0.5, p_rot=0.5, noise_std=0.01,
                 apply_log=True, blur_kernel=5, blur_sigma=1.0, normalize=False):
        assert size[0] == size[1], "rot90 folding assumes a square output size"
        self.size = (int(size[0]), int(size[1]))
        self.p_flip = p_flip
        self.p_rot = p_rot
        self.noise_std = noise_std
        self.apply_log = apply_log
        self.blur_kernel = int(blur_kernel)
        self.blur_sigma = float(blur_sigma)
        self.normalize = normalize

    def __call__(self, img, seed=0):
        img = jnp.asarray(img, jnp.float32)        # stays on device
        batched_in = (img.ndim == 4)
        if img.ndim == 2:
            xb = img[None]                         # (1, H, W)
        elif img.ndim == 3:
            xb = img[:1]                           # first channel, like torch
        elif img.ndim == 4:
            xb = img[:, 0]                         # batch extension: channel 0
        else:
            raise ValueError("expected a 2D/3D/4D input")
        B, Hin, Win = int(xb.shape[0]), int(xb.shape[1]), int(xb.shape[2])
        Ho, Wo = self.size
        P = max(8, -(-max(Hin, Win) // 8) * 8)     # pad contraction to mult of 8

        # ---- host-side random flip / rot decisions (no device syncs) ------
        rng = np.random.default_rng(seed)
        Ah = _bilinear_matrix(Ho, Hin)
        Aw = _bilinear_matrix(Wo, Win)
        L = np.zeros((B, Ho, P), np.float32)
        RT = np.zeros((B, P, Wo), np.float32)
        tflags = np.zeros((B,), bool)
        for b in range(B):
            flip_w = rng.random() < self.p_flip    # flip dims=[2]
            flip_h = rng.random() < self.p_flip    # flip dims=[1]
            do_rot = rng.random() < self.p_rot
            Lh = Ah[::-1] if flip_h else Ah
            Rw = Aw[::-1] if flip_w else Aw
            if do_rot:
                k = int(rng.integers(1, 4))        # rot90 k in {1,2,3}
                if k == 1:                         # Z = J @ Y^T
                    Lm, Rm, tr = Rw[::-1], Lh, True
                elif k == 2:                       # Z = J @ Y @ J
                    Lm, Rm, tr = Lh[::-1], Rw[::-1], False
                else:                              # Z = Y^T @ J
                    Lm, Rm, tr = Rw, Lh[::-1], True
            else:
                Lm, Rm, tr = Lh, Rw, False
            L[b, :, :Lm.shape[1]] = Lm
            RT[b, :Rm.shape[1], :] = Rm.T
            tflags[b] = tr

        noise = None
        if self.noise_std > 0:
            noise = (jax.random.normal(jax.random.PRNGKey(seed), (B, Ho, Wo),
                                       jnp.float32) * self.noise_std)

        csh = _dft_left(Ho, self.blur_kernel, self.blur_sigma)     # (2Ho, Ho) bf16
        cswt = _dft_right_t(Wo, self.blur_kernel, self.blur_sigma)  # (Wo, 2Wo) bf16

        out = _augment_device(xb, jnp.asarray(tflags),
                              jnp.asarray(L, jnp.bfloat16),
                              jnp.asarray(RT, jnp.bfloat16),
                              noise, csh, cswt,
                              apply_log=self.apply_log,
                              normalize=self.normalize)
        # single-image paths return (1, Ho, Wo) like the PyTorch module
        return out[:, None] if batched_in else out


if __name__ == "__main__":
    key = jax.random.PRNGKey(0)
    k1, k2 = jax.random.split(key)

    # batched input (B=2, C=4, 16x16): channel 0 of each image is augmented
    aug = TensorAugmentPallas(size=(128, 128))
    xb = jax.random.normal(k1, (2, 4, 16, 16), jnp.float32)
    out_b = aug(xb, seed=0)
    jax.block_until_ready(out_b)
    assert out_b.shape == (2, 1, 128, 128) and out_b.dtype == jnp.float32
    assert bool(jnp.all(jnp.isfinite(out_b)))

    # single-image 3D input with C != 1 -> first channel only, like the module;
    # also exercises the noise-skip and normalize specializations
    aug2 = TensorAugmentPallas(size=(128, 128), noise_std=0.0, normalize=True)
    xs = jax.random.normal(k2, (4, 16, 16), jnp.float32)
    out_s = aug2(xs, seed=1)
    jax.block_until_ready(out_s)
    assert out_s.shape == (1, 128, 128) and out_s.dtype == jnp.float32
    assert bool(jnp.all(jnp.isfinite(out_s)))

    print("KERNEL_OK")
</pallas_src>

<mosaic_0001>
module attributes {stable_mosaic.version = 11 : i64} {
  func.func @_augment_kernel(%arg0: i32, %arg1: memref<1x16x16xf32, #tpu.memory_space<vmem>>, %arg2: memref<1x128x16xbf16, #tpu.memory_space<vmem>>, %arg3: memref<1x16x128xbf16, #tpu.memory_space<vmem>>, %arg4: memref<1x128x128xf32, #tpu.memory_space<vmem>>, %arg5: memref<256x128xbf16, #tpu.memory_space<vmem>>, %arg6: memref<128x256xbf16, #tpu.memory_space<vmem>>, %arg7: memref<1x128x128xf32, #tpu.memory_space<vmem>>) attributes {dimension_semantics = [#tpu.dimension_semantics<parallel>], iteration_bounds = array<i64: 2>, scalar_prefetch = 0 : i64, scratch_operands = 0 : i64, tpu.core_type = #tpu.core_type<tc>, window_params = [{transform_indices = @transform_0, window_bounds = array<i64: 1, 16, 16>}, {transform_indices = @transform_1, window_bounds = array<i64: 1, 128, 16>}, {transform_indices = @transform_2, window_bounds = array<i64: 1, 16, 128>}, {transform_indices = @transform_3, window_bounds = array<i64: 1, 128, 128>}, {pipeline_mode = #tpu.pipeline_mode<synchronous>, transform_indices = @transform_4, window_bounds = array<i64: 256, 128>}, {pipeline_mode = #tpu.pipeline_mode<synchronous>, transform_indices = @transform_5, window_bounds = array<i64: 128, 256>}, {transform_indices = @transform_6, window_bounds = array<i64: 1, 128, 128>}]} {
    %c0 = arith.constant 0 : index
    %c0_0 = arith.constant 0 : index
    %c0_1 = arith.constant 0 : index
    %0 = vector.load %arg1[%c0, %c0_0, %c0_1] : memref<1x16x16xf32, #tpu.memory_space<vmem>>, vector<1x16x16xf32>
    %1 = vector.shape_cast %0 : vector<1x16x16xf32> to vector<16x16xf32>
    %2 = arith.truncf %1 : vector<16x16xf32> to vector<16x16xbf16>
    %c0_2 = arith.constant 0 : index
    %c0_3 = arith.constant 0 : index
    %c0_4 = arith.constant 0 : index
    %3 = vector.load %arg3[%c0_2, %c0_3, %c0_4] : memref<1x16x128xbf16, #tpu.memory_space<vmem>>, vector<1x16x128xbf16>
    %4 = vector.shape_cast %3 : vector<1x16x128xbf16> to vector<16x128xbf16>
    %cst = arith.constant dense<0.000000e+00> : vector<16x128xf32>
    %5 = tpu.matmul %2, %4, %cst {dimension_numbers = #tpu.dot_dimension_numbers<[1], [0], [0], [1], [0, 0, 1, 1], [], []>} : vector<16x16xbf16>, vector<16x128xbf16>, vector<16x128xf32> -> vector<16x128xf32>
    %c0_5 = arith.constant 0 : index
    %c0_6 = arith.constant 0 : index
    %c0_7 = arith.constant 0 : index
    %6 = vector.load %arg2[%c0_5, %c0_6, %c0_7] : memref<1x128x16xbf16, #tpu.memory_space<vmem>>, vector<1x128x16xbf16>
    %7 = vector.shape_cast %6 : vector<1x128x16xbf16> to vector<128x16xbf16>
    %8 = arith.truncf %5 : vector<16x128xf32> to vector<16x128xbf16>
    %cst_8 = arith.constant dense<0.000000e+00> : vector<128x128xf32>
    %9 = tpu.matmul %7, %8, %cst_8 {dimension_numbers = #tpu.dot_dimension_numbers<[1], [0], [0], [1], [0, 0, 1, 1], [], []>} : vector<128x16xbf16>, vector<16x128xbf16>, vector<128x128xf32> -> vector<128x128xf32>
    %c0_9 = arith.constant 0 : index
    %c0_10 = arith.constant 0 : index
    %c0_11 = arith.constant 0 : index
    %10 = vector.load %arg4[%c0_9, %c0_10, %c0_11] : memref<1x128x128xf32, #tpu.memory_space<vmem>>, vector<1x128x128xf32>
    %11 = vector.shape_cast %10 : vector<1x128x128xf32> to vector<128x128xf32>
    %12 = arith.addf %9, %11 : vector<128x128xf32>
    %13 = arith.truncf %12 : vector<128x128xf32> to vector<128x128xbf16>
    %c0_12 = arith.constant 0 : index
    %c0_13 = arith.constant 0 : index
    %14 = vector.load %arg6[%c0_12, %c0_13] : memref<128x256xbf16, #tpu.memory_space<vmem>>, vector<128x256xbf16>
    %cst_14 = arith.constant dense<0.000000e+00> : vector<128x256xf32>
    %15 = tpu.matmul %13, %14, %cst_14 {dimension_numbers = #tpu.dot_dimension_numbers<[1], [0], [0], [1], [0, 0, 1, 1], [], []>} : vector<128x128xbf16>, vector<128x256xbf16>, vector<128x256xf32> -> vector<128x256xf32>
    %c0_15 = arith.constant 0 : index
    %c0_16 = arith.constant 0 : index
    %16 = vector.load %arg5[%c0_15, %c0_16] : memref<256x128xbf16, #tpu.memory_space<vmem>>, vector<256x128xbf16>
    %17 = arith.truncf %15 : vector<128x256xf32> to vector<128x256xbf16>
    %cst_17 = arith.constant dense<0.000000e+00> : vector<256x256xf32>
    %18 = tpu.matmul %16, %17, %cst_17 {dimension_numbers = #tpu.dot_dimension_numbers<[1], [0], [0], [1], [0, 0, 1, 1], [], []>} : vector<256x128xbf16>, vector<128x256xbf16>, vector<256x256xf32> -> vector<256x256xf32>
    %19 = vector.extract_strided_slice %18 {offsets = [0, 0], sizes = [128, 128], strides = [1, 1]} : vector<256x256xf32> to vector<128x128xf32>
    %20 = vector.extract_strided_slice %18 {offsets = [128, 128], sizes = [128, 128], strides = [1, 1]} : vector<256x256xf32> to vector<128x128xf32>
    %21 = arith.subf %19, %20 : vector<128x128xf32>
    %22 = vector.extract_strided_slice %18 {offsets = [0, 128], sizes = [128, 128], strides = [1, 1]} : vector<256x256xf32> to vector<128x128xf32>
    %23 = vector.extract_strided_slice %18 {offsets = [128, 0], sizes = [128, 128], strides = [1, 1]} : vector<256x256xf32> to vector<128x128xf32>
    %24 = arith.addf %22, %23 : vector<128x128xf32>
    %25 = arith.mulf %21, %21 : vector<128x128xf32>
    %26 = arith.mulf %24, %24 : vector<128x128xf32>
    %27 = arith.addf %25, %26 : vector<128x128xf32>
    %28 = math.sqrt %27 : vector<128x128xf32>
    %29 = math.log1p %28 : vector<128x128xf32>
    %c0_18 = arith.constant 0 : index
    %c0_19 = arith.constant 0 : index
    %c0_20 = arith.constant 0 : index
    %30 = vector.load %arg7[%c0_18, %c0_19, %c0_20] : memref<1x128x128xf32, #tpu.memory_space<vmem>>, vector<1x128x128xf32>
    %31 = vector.shape_cast %30 : vector<1x128x128xf32> to vector<128x128xf32>
    %32 = vector.shape_cast %29 : vector<128x128xf32> to vector<1x128x128xf32>
    tpu.vector_store %arg7[%c0_18, %c0_19, %c0_20], %32 {strides = array<i32>} : memref<1x128x128xf32, #tpu.memory_space<vmem>>, vector<1x128x128xf32>,
    return
  }
  func.func @transform_0(%arg0: i32) -> (i32, i32, i32) {
    %c0_i32 = arith.constant 0 : i32
    %c0_i32_0 = arith.constant 0 : i32
    %c0_i32_1 = arith.constant 0 : i32
    return %arg0, %c0_i32, %c0_i32_0 : i32, i32, i32
  }
  func.func @transform_1(%arg0: i32) -> (i32, i32, i32) {
    %c0_i32 = arith.constant 0 : i32
    %c0_i32_0 = arith.constant 0 : i32
    %c0_i32_1 = arith.constant 0 : i32
    return %arg0, %c0_i32, %c0_i32_0 : i32, i32, i32
  }
  func.func @transform_2(%arg0: i32) -> (i32, i32, i32) {
    %c0_i32 = arith.constant 0 : i32
    %c0_i32_0 = arith.constant 0 : i32
    %c0_i32_1 = arith.constant 0 : i32
    return %arg0, %c0_i32, %c0_i32_0 : i32, i32, i32
  }
  func.func @transform_3(%arg0: i32) -> (i32, i32, i32) {
    %c0_i32 = arith.constant 0 : i32
    %c0_i32_0 = arith.constant 0 : i32
    %c0_i32_1 = arith.constant 0 : i32
    return %arg0, %c0_i32, %c0_i32_0 : i32, i32, i32
  }
  func.func @transform_4(%arg0: i32) -> (i32, i32) {
    %c0_i32 = arith.constant 0 : i32
    %c0_i32_0 = arith.constant 0 : i32
    %c0_i32_1 = arith.constant 0 : i32
    return %c0_i32, %c0_i32_0 : i32, i32
  }
  func.func @transform_5(%arg0: i32) -> (i32, i32) {
    %c0_i32 = arith.constant 0 : i32
    %c0_i32_0 = arith.constant 0 : i32
    %c0_i32_1 = arith.constant 0 : i32
    return %c0_i32, %c0_i32_0 : i32, i32
  }
  func.func @transform_6(%arg0: i32) -> (i32, i32, i32) {
    %c0_i32 = arith.constant 0 : i32
    %c0_i32_0 = arith.constant 0 : i32
    %c0_i32_1 = arith.constant 0 : i32
    return %arg0, %c0_i32, %c0_i32_0 : i32, i32, i32
  }
}

</mosaic_0001>

<llo_original>
// kernel: _augment_device.1
$region0: #{_augment_device.1}
  #allocation0 [shape = 'u32[]', space=smem, size = 0x4, offset = 0x4, fixed_abs, tag = 'smem constant byte address 0x4 - core index']
  #allocation1 [shape = 'u32[72,128]{1,0:T(1,128)}', space=vmem, size = 0x9000, scoped, tag = 'internal scratch']
  %s0 = inlined_call_operand.vmem [shape: f32[2,16,16], index: 0, kind: input, shape index: {}]
  %s1 = inlined_call_operand.vmem [shape: bf16[2,128,16], index: 1, kind: input, shape index: {}]
  %s2 = inlined_call_operand.vmem [shape: bf16[2,16,128], index: 2, kind: input, shape index: {}]
  %s3 = inlined_call_operand.hbm [shape: f32[2,128,128], index: 3, kind: input, shape index: {}]
  %s4 = inlined_call_operand.vmem [shape: bf16[256,128], index: 4, kind: input, shape index: {}]
  %s5 = inlined_call_operand.hbm [shape: bf16[128,256], index: 5, kind: input, shape index: {}]
  %s6 = inlined_call_operand.hbm [shape: f32[2,128,128], index: 6, kind: output, shape index: {}]
  %s7 = sld [smem:[#allocation0]]
  $region65: #{_augment_device.1} parent=0
    _
  %s9 = ssub.s32 1, %s7
  %s10 = scalar_select 0, %s9, %s7
  $region1: #{_augment_device.1} parent=0
    #allocation2 [shape = 'u8[131072]{0}', space=vmem, size = 0x20000, scoped, tag = 'input window, operand 3']
    #allocation3 [shape = 's32[2]{0}', space=sflag, size = 0x8, scoped, tag = 'scoped memory for _augment_device.1']
    #allocation4 [shape = 's32[2]{0}', space=sflag, size = 0x8, scoped, tag = 'scoped memory for _augment_device.1']
    #allocation5 [shape = 'u8[65536]{0}', space=vmem, size = 0x10000, scoped, tag = 'input window, operand 5, single buffered']
    #allocation6 [shape = 's32[1]{0}', space=sflag, size = 0x4, scoped, tag = 'scoped memory for _augment_device.1']
    #allocation7 [shape = 'u8[131072]{0}', space=vmem, size = 0x20000, scoped, tag = 'output window, operand 0']
    %11 = vsyncpa [#allocation3], 0
    %s12 = scalar_lea.sflag [#allocation3], 1
    %13 = vsyncpa %s12, 0
    %14 = vsyncpa [#allocation6], 0
    %15 = vsyncpa [#allocation4], 0
    %s16 = scalar_lea.sflag [#allocation4], 1
    %17 = vsyncpa %s16, 0
    loop: start=0, step=1, limit=4
    $region2: #{_augment_device.1} parent=1 // loop_pre_header
      _
    $region3: #{_augment_device.1} parent=1 // loop_header
      %s19 = sphi 0, %s23
      %p20 = scmp.ge.s32.totalorder %s19, 4
      %s29 = sphi 0, %s31
      %s32 = sphi 0, %s29
      %s33 = sphi 0, %s32
      %s49 = sphi 0, %s33
      %s55 = sphi 0, %s57
      %s58 = sphi 0, %s55
      %s59 = sphi 0, %s58
      %s75 = sphi 0, %s59
      %s81 = sphi 0, %s83
      %s84 = sphi 0, %s81
      %s85 = sphi 0, %s84
      %s101 = sphi 0, %s85
      %s107 = sphi 0, %s109
      %s110 = sphi 0, %s107
      %s111 = sphi 0, %s110
      %s127 = sphi 0, %s111
      %s131 = sphi 0, %s131
      %s133 = sphi 0, %s131
      %s134 = sphi 0, %s133
      %s148 = sphi 0, %s134
      %s152 = sphi 0, %s152
      %s154 = sphi 0, %s152
      %s155 = sphi 0, %s154
      %s169 = sphi 0, %s155
      %s175 = sphi 0, %s177
      %s178 = sphi 0, %s175
      %s179 = sphi 0, %s178
      %s195 = sphi 0, %s179
    $region4: #{_augment_device.1} parent=1 // loop_header_branch
      %22 = sbr.rel (%p20) target = $region8
    $region5: #{_augment_device.1} parent=1 // loop_body
      %s24 = ssub.s32 %s19, 1
      %s25 = ssub.s32 %s19, 2
      %s26 = sadd.s32 %s19, 1
      %s27 = ssub.s32 %s19, %s26
      %p28 = scmp.eq.s32.totalorder %s27, 0
      %s30 = sadd.s32 %s29, 1
      %s31 = scalar_select %p28, %s29, %s30
      %p34 = pneg %p28
      %p35 = scmp.eq.s32.totalorder %s19, 1
      %p36 = por %p34, %p35
      %p37 = scmp.ne.s32.totalorder %s29, %s32
      %p38 = scmp.eq.s32.totalorder %s19, 0
      %p39 = por %p37, %p38
      %p40 = scmp.ne.s32.totalorder %s29, %s32
      %p41 = scmp.eq.s32.totalorder %s24, 1
      %p42 = por %p40, %p41
      %p43 = scmp.ne.s32.totalorder %s32, %s33
      %p44 = scmp.eq.s32.totalorder %s24, 0
      %p45 = por %p43, %p44
      %p46 = scmp.ne.s32.totalorder %s32, %s33
      %p47 = scmp.eq.s32.totalorder %s25, 1
      %p48 = por %p46, %p47
      %p50 = scmp.ne.s32.totalorder %s33, %s49
      %p51 = scmp.eq.s32.totalorder %s25, 0
      %p52 = por %p50, %p51
      %s53 = ssub.s32 %s19, %s26
      %p54 = scmp.eq.s32.totalorder %s53, 0
      %s56 = sadd.s32 %s55, 1
      %s57 = scalar_select %p54, %s55, %s56
      %p60 = pneg %p54
      %p61 = scmp.eq.s32.totalorder %s19, 1
      %p62 = por %p60, %p61
      %p63 = scmp.ne.s32.totalorder %s55, %s58
      %p64 = scmp.eq.s32.totalorder %s19, 0
      %p65 = por %p63, %p64
      %p66 = scmp.ne.s32.totalorder %s55, %s58
      %p67 = scmp.eq.s32.totalorder %s24, 1
      %p68 = por %p66, %p67
      %p69 = scmp.ne.s32.totalorder %s58, %s59
      %p70 = scmp.eq.s32.totalorder %s24, 0
      %p71 = por %p69, %p70
      %p72 = scmp.ne.s32.totalorder %s58, %s59
      %p73 = scmp.eq.s32.totalorder %s25, 1
      %p74 = por %p72, %p73
      %p76 = scmp.ne.s32.totalorder %s59, %s75
      %p77 = scmp.eq.s32.totalorder %s25, 0
      %p78 = por %p76, %p77
      %s79 = ssub.s32 %s19, %s26
      %p80 = scmp.eq.s32.totalorder %s79, 0
      %s82 = sadd.s32 %s81, 1
      %s83 = scalar_select %p80, %s81, %s82
      %p86 = pneg %p80
      %p87 = scmp.eq.s32.totalorder %s19, 1
      %p88 = por %p86, %p87
      %p89 = scmp.ne.s32.totalorder %s81, %s84
      %p90 = scmp.eq.s32.totalorder %s19, 0
      %p91 = por %p89, %p90
      %p92 = scmp.ne.s32.totalorder %s81, %s84
      %p93 = scmp.eq.s32.totalorder %s24, 1
      %p94 = por %p92, %p93
      %p95 = scmp.ne.s32.totalorder %s84, %s85
      %p96 = scmp.eq.s32.totalorder %s24, 0
      %p97 = por %p95, %p96
      %p98 = scmp.ne.s32.totalorder %s84, %s85
      %p99 = scmp.eq.s32.totalorder %s25, 1
      %p100 = por %p98, %p99
      %p102 = scmp.ne.s32.totalorder %s85, %s101
      %p103 = scmp.eq.s32.totalorder %s25, 0
      %p104 = por %p102, %p103
      %s105 = ssub.s32 %s19, %s26
      %p106 = scmp.eq.s32.totalorder %s105, 0
      %s108 = sadd.s32 %s107, 1
      %s109 = scalar_select %p106, %s107, %s108
      %p112 = pneg %p106
      %p113 = scmp.eq.s32.totalorder %s19, 1
      %p114 = por %p112, %p113
      %p115 = scmp.ne.s32.totalorder %s107, %s110
      %p116 = scmp.eq.s32.totalorder %s19, 0
      %p117 = por %p115, %p116
      %p118 = scmp.ne.s32.totalorder %s107, %s110
      %p119 = scmp.eq.s32.totalorder %s24, 1
      %p120 = por %p118, %p119
      %p121 = scmp.ne.s32.totalorder %s110, %s111
      %p122 = scmp.eq.s32.totalorder %s24, 0
      %p123 = por %p121, %p122
      %p124 = scmp.ne.s32.totalorder %s110, %s111
      %p125 = scmp.eq.s32.totalorder %s25, 1
      %p126 = por %p124, %p125
      %p128 = scmp.ne.s32.totalorder %s111, %s127
      %p129 = scmp.eq.s32.totalorder %s25, 0
      %p130 = por %p128, %p129
      %s132 = sadd.s32 %s131, 1
      %p135 = scmp.eq.s32.totalorder %s19, 1
      %p136 = scmp.ne.s32.totalorder %s131, %s133
      %p137 = scmp.eq.s32.totalorder %s19, 0
      %p138 = por %p136, %p137
      %p139 = scmp.ne.s32.totalorder %s131, %s133
      %p140 = scmp.eq.s32.totalorder %s24, 1
      %p141 = por %p139, %p140
      %p142 = scmp.ne.s32.totalorder %s133, %s134
      %p143 = scmp.eq.s32.totalorder %s24, 0
      %p144 = por %p142, %p143
      %p145 = scmp.ne.s32.totalorder %s133, %s134
      %p146 = scmp.eq.s32.totalorder %s25, 1
      %p147 = por %p145, %p146
      %p149 = scmp.ne.s32.totalorder %s134, %s148
      %p150 = scmp.eq.s32.totalorder %s25, 0
      %p151 = por %p149, %p150
      %s153 = sadd.s32 %s152, 1
      %p156 = scmp.eq.s32.totalorder %s19, 1
      %p157 = scmp.ne.s32.totalorder %s152, %s154
      %p158 = scmp.eq.s32.totalorder %s19, 0
      %p159 = por %p157, %p158
      %p160 = scmp.ne.s32.totalorder %s152, %s154
      %p161 = scmp.eq.s32.totalorder %s24, 1
      %p162 = por %p160, %p161
      %p163 = scmp.ne.s32.totalorder %s154, %s155
      %p164 = scmp.eq.s32.totalorder %s24, 0
      %p165 = por %p163, %p164
      %p166 = scmp.ne.s32.totalorder %s154, %s155
      %p167 = scmp.eq.s32.totalorder %s25, 1
      %p168 = por %p166, %p167
      %p170 = scmp.ne.s32.totalorder %s155, %s169
      %p171 = scmp.eq.s32.totalorder %s25, 0
      %p172 = por %p170, %p171
      %s173 = ssub.s32 %s19, %s26
      %p174 = scmp.eq.s32.totalorder %s173, 0
      %s176 = sadd.s32 %s175, 1
      %s177 = scalar_select %p174, %s175, %s176
      %p180 = pneg %p174
      %p181 = scmp.eq.s32.totalorder %s19, 1
      %p182 = por %p180, %p181
      %p183 = scmp.ne.s32.totalorder %s175, %s178
      %p184 = scmp.eq.s32.totalorder %s19, 0
      %p185 = por %p183, %p184
      %p186 = scmp.ne.s32.totalorder %s175, %s178
      %p187 = scmp.eq.s32.totalorder %s24, 1
      %p188 = por %p186, %p187
      %p189 = scmp.ne.s32.totalorder %s178, %s179
      %p190 = scmp.eq.s32.totalorder %s24, 0
      %p191 = por %p189, %p190
      %p192 = scmp.ne.s32.totalorder %s178, %s179
      %p193 = scmp.eq.s32.totalorder %s25, 1
      %p194 = por %p192, %p193
      %p196 = scmp.ne.s32.totalorder %s179, %s195
      %p197 = scmp.eq.s32.totalorder %s25, 0
      %p198 = por %p196, %p197
      %p199 = scmp.le.s32.totalorder 1, %s19
      %p200 = scmp.lt.s32.totalorder %s19, 3
      %p201 = pnand %p199, %p200
      %p202 = pneg %p201
      // Predicated region
      $region9: #{_augment_device.1} parent=5 // pred_check
        _
      $region10: #{_augment_device.1} parent=5 // pred_check_branch
        %204 = sbr.rel (%p201) target = $region12
      $region11: #{_augment_device.1} parent=5 // pred_region
        %s205 = ssub.s32 %s19, 1
        // Predicated region
        $region13: #{_augment_device.1} parent=11 // pred_check
          %p206 = pneg %p144
        $region14: #{_augment_device.1} parent=11 // pred_check_branch
          %208 = sbr.rel (%p206) target = $region16
        $region15: #{_augment_device.1} parent=11 // pred_region
          _
        $region16: #{_augment_device.1} parent=11 // pred_fallthru
          _
        // Predicated region
        $region17: #{_augment_device.1} parent=11 // pred_check
          %p209 = pneg %p165
        $region18: #{_augment_device.1} parent=11 // pred_check_branch
          %211 = sbr.rel (%p209) target = $region20
        $region19: #{_augment_device.1} parent=11 // pred_region
          %213 = vsyncadd [#allocation6], 0
          %s214 = sshll.u32 %s5, 4
          %s215 = int_to_ptr.hbm [resolvable:$true] %s214
          %s216 = sshll.u32 [#allocation5], 4
          %s217 = int_to_ptr.vmem [resolvable:$true] %s216
          %222 = dma.hbm_to_vmem [thread:$0]  %s215, 2048, %s217, [#allocation6], 128, 128, 8
        $region20: #{_augment_device.1} parent=11 // pred_fallthru
          _
      $region12: #{_augment_device.1} parent=5 // pred_fallthru
        _
      %p223 = scmp.lt.s32.totalorder %s19, 2
      // Predicated region
      $region21: #{_augment_device.1} parent=5 // pred_check
        %p224 = pneg %p223
      $region22: #{_augment_device.1} parent=5 // pred_check_branch
        %226 = sbr.rel (%p224) target = $region24
      $region23: #{_augment_device.1} parent=5 // pred_region
        // Predicated region
        $region25: #{_augment_device.1} parent=23 // pred_check
          %p227 = pneg %p39
        $region26: #{_augment_device.1} parent=23 // pred_check_branch
          %229 = sbr.rel (%p227) target = $region28
        $region27: #{_augment_device.1} parent=23 // pred_region
          %p230 = scmp.lt.s32.totalorder %s19, 1
          %s231 = scalar_select %p230, %s19, 1
          %s232 = smul.addr %s231, 2
          %s233 = smul.addr %s232, 8
          %s234 = scalar_lea.vmem %s0, %s233
        $region28: #{_augment_device.1} parent=23 // pred_fallthru
          _
        // Predicated region
        $region29: #{_augment_device.1} parent=23 // pred_check
          %p235 = pneg %p65
        $region30: #{_augment_device.1} parent=23 // pred_check_branch
          %237 = sbr.rel (%p235) target = $region32
        $region31: #{_augment_device.1} parent=23 // pred_region
          %p238 = scmp.lt.s32.totalorder %s19, 1
          %s239 = scalar_select %p238, %s19, 1
          %s240 = smul.addr %s239, 16
          %s241 = smul.addr %s240, 4
          %s242 = scalar_lea.vmem %s1, %s241
        $region32: #{_augment_device.1} parent=23 // pred_fallthru
          _
        // Predicated region
        $region33: #{_augment_device.1} parent=23 // pred_check
          %p243 = pneg %p91
        $region34: #{_augment_device.1} parent=23 // pred_check_branch
          %245 = sbr.rel (%p243) target = $region36
        $region35: #{_augment_device.1} parent=23 // pred_region
          %p246 = scmp.lt.s32.totalorder %s19, 1
          %s247 = scalar_select %p246, %s19, 1
          %s248 = smul.addr %s247, 2
          %s249 = smul.addr %s248, 4
          %s250 = scalar_lea.vmem %s2, %s249
        $region36: #{_augment_device.1} parent=23 // pred_fallthru
          _
        // Predicated region
        $region37: #{_augment_device.1} parent=23 // pred_check
          %p251 = pneg %p117
        $region38: #{_augment_device.1} parent=23 // pred_check_branch
          %253 = sbr.rel (%p251) target = $region40
        $region39: #{_augment_device.1} parent=23 // pred_region
          %s254 = sand.u32 %s107, 1
          %s255 = scalar_lea.sflag [#allocation3], %s254
          %s256 = sand.u32 %s107, 1
          %s257 = smul.addr %s256, 128
          %s258 = scalar_lea.vmem [#allocation2], %s257
          %260 = vsyncadd %s255, 0
          %s261 = smul.addr %s19, 16
          %s262 = smul.addr %s261, 8
          %s263 = scalar_lea.hbm %s3, %s262
          %s264 = sshll.u32 %s263, 4
          %s265 = int_to_ptr.hbm [resolvable:$true] %s264
          %s266 = sshll.u32 %s258, 4
          %s267 = int_to_ptr.vmem [resolvable:$true] %s266
          %272 = dma.hbm_to_vmem [thread:$0]  %s265, 2048, %s267, %s255, 128, 128, 8
        $region40: #{_augment_device.1} parent=23 // pred_fallthru
          _
      $region24: #{_augment_device.1} parent=5 // pred_fallthru
        _
      %p273 = scmp.le.s32.totalorder 1, %s19
      %p274 = scmp.lt.s32.totalorder %s19, 3
      %p275 = pnand %p273, %p274
      %p276 = pneg %p275
      // Predicated region
      $region41: #{_augment_device.1} parent=5 // pred_check
        _
      $region42: #{_augment_device.1} parent=5 // pred_check_branch
        %278 = sbr.rel (%p275) target = $region44
      $region43: #{_augment_device.1} parent=5 // pred_region
        %s279 = ssub.s32 %s19, 1
        %s280 = sand.u32 %s110, 1
        %s281 = scalar_lea.sflag [#allocation3], %s280
        %s282 = sand.u32 %s110, 1
        %s283 = smul.addr %s282, 128
        %s284 = scalar_lea.vmem [#allocation2], %s283
        // Predicated region
        $region45: #{_augment_device.1} parent=43 // pred_check
          %p285 = pneg %p123
        $region46: #{_augment_device.1} parent=43 // pred_check_branch
          %287 = sbr.rel (%p285) target = $region48
        $region47: #{_augment_device.1} parent=43 // pred_region
          %289 = dma.done %s281, 2048
        $region48: #{_augment_device.1} parent=43 // pred_fallthru
          _
        // Predicated region
        $region49: #{_augment_device.1} parent=43 // pred_check
          %p290 = pneg %p165
        $region50: #{_augment_device.1} parent=43 // pred_check_branch
          %292 = sbr.rel (%p290) target = $region52
        $region51: #{_augment_device.1} parent=43 // pred_region
          %294 = dma.done [#allocation6], 2048
        $region52: #{_augment_device.1} parent=43 // pred_fallthru
          _
        %p295 = scmp.lt.s32.totalorder %s24, 1
        %s296 = scalar_select %p295, %s24, 1
        %s297 = smul.addr %s296, 2
        %s298 = smul.addr %s297, 8
        %s299 = scalar_lea.vmem %s0, %s298
        %p300 = pneg %p45
        %p301 = pneg %p42
        %p302 = scmp.lt.s32.totalorder %s24, 1
        %s303 = scalar_select %p302, %s24, 1
        %s304 = smul.addr %s303, 16
        %s305 = smul.addr %s304, 4
        %s306 = scalar_lea.vmem %s1, %s305
        %p307 = pneg %p71
        %p308 = pneg %p68
        %p309 = scmp.lt.s32.totalorder %s24, 1
        %s310 = scalar_select %p309, %s24, 1
        %s311 = smul.addr %s310, 2
        %s312 = smul.addr %s311, 4
        %s313 = scalar_lea.vmem %s2, %s312
        %p314 = pneg %p97
        %p315 = pneg %p94
        %s316 = sand.u32 %s110, 1
        %s317 = scalar_lea.sflag [#allocation3], %s316
        %s318 = sand.u32 %s110, 1
        %s319 = smul.addr %s318, 128
        %s320 = scalar_lea.vmem [#allocation2], %s319
        %p321 = pneg %p123
        %p322 = pneg %p120
        %p323 = pneg %p144
        %p324 = pneg %p141
        %p325 = pneg %p165
        %p326 = pneg %p162
        %p327 = pneg %p191
        %p328 = pneg %p188
        %s329 = sand.u32 %s178, 1
        %s330 = scalar_lea.sflag [#allocation4], %s329
        %s331 = sand.u32 %s178, 1
        %s332 = smul.addr %s331, 128
        %s333 = scalar_lea.vmem [#allocation7], %s332
        %p334 = scmp.lt.s32.totalorder %s24, 1
        %s335 = scalar_select %p334, %s24, 1
        %s336 = smul.addr %s335, 2
        %s337 = smul.addr %s336, 8
        %s338 = scalar_lea.vmem %s0, %s337
        %p339 = scmp.lt.s32.totalorder %s24, 1
        %s340 = scalar_select %p339, %s24, 1
        %s341 = smul.addr %s340, 16
        %s342 = smul.addr %s341, 4
        %s343 = scalar_lea.vmem %s1, %s342
        %p344 = scmp.lt.s32.totalorder %s24, 1
        %s345 = scalar_select %p344, %s24, 1
        %s346 = smul.addr %s345, 2
        %s347 = smul.addr %s346, 4
        %s348 = scalar_lea.vmem %s2, %s347
        %v350 = vld [vmem:[%s338] sm:$0xff]
        %v351 = vld [vmem:[%s338 + $0x8] sm:$0xff]
        %v352 = vpack.c.bf16 %v351, %v350
        %v353 = vld [vmem:[%s348] sm:$0xf]
        %v354 = vld [vmem:[%s348 + $0x4] sm:$0xf]
        %v357 = vunpack.c.l.b16 %v353
        %v358 = vunpack.c.l.b16 %v354
        %v359 = vpack.c.b16 %v358, %v357
        %vm361 = vcmask 130048
        %v363 = vsel %vm361, %v352, 0
        %365 = vmatpush.bf16.msra.mxu0 0
        %366 = vmatpush.bf16.msra.mxu0 0
        %367 = vmatpush.bf16.msra.mxu0 0
        %368 = vmatpush.bf16.msra.mxu0 0
        %369 = vmatpush.bf16.msra.mxu0 0
        %370 = vmatpush.bf16.msra.mxu0 0
        %371 = vmatpush.bf16.msra.mxu0 0
        %372 = vmatpush.bf16.msra.mxu0 %v359
        %373 = vmatmul.bf16.gmra.mxu0 %v363
        %v374 = vpop.f32.mrf.mxu0
        %v375 = vadd.f32 0.0, %v374
        %v376 = vpop.f32.mrf.mxu0
        %v377 = vadd.f32 0.0, %v376
        %378 = vdwg.mxu0
        %v379 = vld [vmem:[%s343] sm:$0xf]
        %v380 = vld [vmem:[%s343 + $0x4] sm:$0xf]
        %v381 = vld [vmem:[%s343 + $0x8] sm:$0xf]
        %v382 = vld [vmem:[%s343 + $0xc] sm:$0xf]
        %v383 = vld [vmem:[%s343 + $0x10] sm:$0xf]
        %v384 = vld [vmem:[%s343 + $0x14] sm:$0xf]
        %v385 = vld [vmem:[%s343 + $0x18] sm:$0xf]
        %v386 = vld [vmem:[%s343 + $0x1c] sm:$0xf]
        %v387 = vld [vmem:[%s343 + $0x20] sm:$0xf]
        %v388 = vld [vmem:[%s343 + $0x24] sm:$0xf]
        %v389 = vld [vmem:[%s343 + $0x28] sm:$0xf]
        %v390 = vld [vmem:[%s343 + $0x2c] sm:$0xf]
        %v391 = vld [vmem:[%s343 + $0x30] sm:$0xf]
        %v392 = vld [vmem:[%s343 + $0x34] sm:$0xf]
        %v393 = vld [vmem:[%s343 + $0x38] sm:$0xf]
        %v394 = vld [vmem:[%s343 + $0x3c] sm:$0xf]
        %v395 = vpack.c.bf16 %v377, %v375
        %v396 = vld [vmem:[%s284] sm:$0xff]
        %v397 = vld [vmem:[%s284 + $0x8] sm:$0xff]
        %v398 = vld [vmem:[%s284 + $0x10] sm:$0xff]
        %v399 = vld [vmem:[%s284 + $0x18] sm:$0xff]
        %v400 = vld [vmem:[%s284 + $0x20] sm:$0xff]
        %v401 = vld [vmem:[%s284 + $0x28] sm:$0xff]
        %v402 = vld [vmem:[%s284 + $0x30] sm:$0xff]
        %v403 = vld [vmem:[%s284 + $0x38] sm:$0xff]
        %v404 = vld [vmem:[%s284 + $0x40] sm:$0xff]
        %v405 = vld [vmem:[%s284 + $0x48] sm:$0xff]
        %v406 = vld [vmem:[%s284 + $0x50] sm:$0xff]
        %v407 = vld [vmem:[%s284 + $0x58] sm:$0xff]
        %v408 = vld [vmem:[%s284 + $0x60] sm:$0xff]
        %v409 = vld [vmem:[%s284 + $0x68] sm:$0xff]
        %v410 = vld [vmem:[%s284 + $0x70] sm:$0xff]
        %v411 = vld [vmem:[%s284 + $0x78] sm:$0xff]
        %v428 = vunpack.c.l.b16 %v379
        %v429 = vunpack.c.l.b16 %v380
        %v430 = vunpack.c.l.b16 %v381
        %v431 = vunpack.c.l.b16 %v382
        %v432 = vunpack.c.l.b16 %v383
        %v433 = vunpack.c.l.b16 %v384
        %v434 = vunpack.c.l.b16 %v385
        %v435 = vunpack.c.l.b16 %v386
        %v436 = vunpack.c.l.b16 %v387
        %v437 = vunpack.c.l.b16 %v388
        %v438 = vunpack.c.l.b16 %v389
        %v439 = vunpack.c.l.b16 %v390
        %v440 = vunpack.c.l.b16 %v391
        %v441 = vunpack.c.l.b16 %v392
        %v442 = vunpack.c.l.b16 %v393
        %v443 = vunpack.c.l.b16 %v394
        %v444 = vpack.c.b16 %v429, %v428
        %v445 = vpack.c.b16 %v431, %v430
        %v446 = vpack.c.b16 %v433, %v432
        %v447 = vpack.c.b16 %v435, %v434
        %v448 = vpack.c.b16 %v437, %v436
        %v449 = vpack.c.b16 %v439, %v438
        %v450 = vpack.c.b16 %v441, %v440
        %v451 = vpack.c.b16 %v443, %v442
        %v453 = vsel %vm361, %v444, 0
        %v456 = vsel %vm361, %v445, 0
        %v459 = vsel %vm361, %v446, 0
        %v462 = vsel %vm361, %v447, 0
        %v465 = vsel %vm361, %v448, 0
        %v468 = vsel %vm361, %v449, 0
        %v471 = vsel %vm361, %v450, 0
        %v474 = vsel %vm361, %v451, 0
        %476 = vmatpush.bf16.msra.mxu0 0
        %477 = vmatpush.bf16.msra.mxu0 0
        %478 = vmatpush.bf16.msra.mxu0 0
        %479 = vmatpush.bf16.msra.mxu0 0
        %480 = vmatpush.bf16.msra.mxu0 0
        %481 = vmatpush.bf16.msra.mxu0 0
        %482 = vmatpush.bf16.msra.mxu0 0
        %483 = vmatpush.bf16.msra.mxu0 %v395
        %484 = vmatmul.bf16.gmra.mxu0 %v453
        %v485 = vpop.f32.mrf.mxu0
        %v486 = vadd.f32 %v396, %v485
        %v487 = vpop.f32.mrf.mxu0
        %v488 = vadd.f32 %v397, %v487
        %489 = vmatmul.bf16.gmra.mxu0 %v456
        %v490 = vpop.f32.mrf.mxu0
        %v491 = vadd.f32 %v398, %v490
        %v492 = vpop.f32.mrf.mxu0
        %v493 = vadd.f32 %v399, %v492
        %494 = vmatmul.bf16.gmra.mxu0 %v459
        %v495 = vpop.f32.mrf.mxu0
        %v496 = vadd.f32 %v400, %v495
        %v497 = vpop.f32.mrf.mxu0
        %v498 = vadd.f32 %v401, %v497
        %499 = vmatmul.bf16.gmra.mxu0 %v462
        %v500 = vpop.f32.mrf.mxu0
        %v501 = vadd.f32 %v402, %v500
        %v502 = vpop.f32.mrf.mxu0
        %v503 = vadd.f32 %v403, %v502
        %504 = vmatmul.bf16.gmra.mxu0 %v465
        %v505 = vpop.f32.mrf.mxu0
        %v506 = vadd.f32 %v404, %v505
        %v507 = vpop.f32.mrf.mxu0
        %v508 = vadd.f32 %v405, %v507
        %509 = vmatmul.bf16.gmra.mxu0 %v468
        %v510 = vpop.f32.mrf.mxu0
        %v511 = vadd.f32 %v406, %v510
        %v512 = vpop.f32.mrf.mxu0
        %v513 = vadd.f32 %v407, %v512
        %514 = vmatmul.bf16.gmra.mxu0 %v471
        %v515 = vpop.f32.mrf.mxu0
        %v516 = vadd.f32 %v408, %v515
        %v517 = vpop.f32.mrf.mxu0
        %v518 = vadd.f32 %v409, %v517
        %519 = vmatmul.bf16.gmra.mxu0 %v474
        %v520 = vpop.f32.mrf.mxu0
        %v521 = vadd.f32 %v410, %v520
        %v522 = vpop.f32.mrf.mxu0
        %v523 = vadd.f32 %v411, %v522
        %524 = vdwg.mxu0
        %v525 = vpack.c.bf16 %v488, %v486
        %v526 = vpack.c.bf16 %v493, %v491
        %v527 = vpack.c.bf16 %v498, %v496
        %v528 = vpack.c.bf16 %v503, %v501
        %v529 = vpack.c.bf16 %v508, %v506
        %v530 = vpack.c.bf16 %v513, %v511
        %v531 = vpack.c.bf16 %v518, %v516
        %v532 = vpack.c.bf16 %v523, %v521
        %v533 = vld [vmem:[#allocation5] sm:$0xff]
        %v534 = vld [vmem:[#allocation5 + $0x8] sm:$0xff]
        %v535 = vld [vmem:[#allocation5 + $0x10] sm:$0xff]
        %v536 = vld [vmem:[#allocation5 + $0x18] sm:$0xff]
        %v537 = vld [vmem:[#allocation5 + $0x20] sm:$0xff]
        %v538 = vld [vmem:[#allocation5 + $0x28] sm:$0xff]
        %v539 = vld [vmem:[#allocation5 + $0x30] sm:$0xff]
        %v540 = vld [vmem:[#allocation5 + $0x38] sm:$0xff]
        %v541 = vld [vmem:[#allocation5 + $0x40] sm:$0xff]
        %v542 = vld [vmem:[#allocation5 + $0x48] sm:$0xff]
        %v543 = vld [vmem:[#allocation5 + $0x50] sm:$0xff]
        %v544 = vld [vmem:[#allocation5 + $0x58] sm:$0xff]
        %v545 = vld [vmem:[#allocation5 + $0x60] sm:$0xff]
        %v546 = vld [vmem:[#allocation5 + $0x68] sm:$0xff]
        %v547 = vld [vmem:[#allocation5 + $0x70] sm:$0xff]
        %v548 = vld [vmem:[#allocation5 + $0x78] sm:$0xff]
        %v565 = vunpack.c.l.b16 %v533
        %v566 = vunpack.c.h.b16 %v533
        %v567 = vunpack.c.l.b16 %v534
        %v568 = vunpack.c.h.b16 %v534
        %v569 = vunpack.c.l.b16 %v535
        %v570 = vunpack.c.h.b16 %v535
        %v571 = vunpack.c.l.b16 %v536
        %v572 = vunpack.c.h.b16 %v536
        %v573 = vunpack.c.l.b16 %v537
        %v574 = vunpack.c.h.b16 %v537
        %v575 = vunpack.c.l.b16 %v538
        %v576 = vunpack.c.h.b16 %v538
        %v577 = vunpack.c.l.b16 %v539
        %v578 = vunpack.c.h.b16 %v539
        %v579 = vunpack.c.l.b16 %v540
        %v580 = vunpack.c.h.b16 %v540
        %v581 = vunpack.c.l.b16 %v541
        %v582 = vunpack.c.h.b16 %v541
        %v583 = vunpack.c.l.b16 %v542
        %v584 = vunpack.c.h.b16 %v542
        %v585 = vunpack.c.l.b16 %v543
        %v586 = vunpack.c.h.b16 %v543
        %v587 = vunpack.c.l.b16 %v544
        %v588 = vunpack.c.h.b16 %v544
        %v589 = vunpack.c.l.b16 %v545
        %v590 = vunpack.c.h.b16 %v545
        %v591 = vunpack.c.l.b16 %v546
        %v592 = vunpack.c.h.b16 %v546
        %v593 = vunpack.c.l.b16 %v547
        %v594 = vunpack.c.h.b16 %v547
        %v595 = vunpack.c.l.b16 %v548
        %v596 = vunpack.c.h.b16 %v548
        %v597 = vpack.c.b16 %v567, %v565
        %v598 = vpack.c.b16 %v568, %v566
        %v599 = vpack.c.b16 %v571, %v569
        %v600 = vpack.c.b16 %v572, %v570
        %v601 = vpack.c.b16 %v575, %v573
        %v602 = vpack.c.b16 %v576, %v574
        %v603 = vpack.c.b16 %v579, %v577
        %v604 = vpack.c.b16 %v580, %v578
        %v605 = vpack.c.b16 %v583, %v581
        %v606 = vpack.c.b16 %v584, %v582
        %v607 = vpack.c.b16 %v587, %v585
        %v608 = vpack.c.b16 %v588, %v586
        %v609 = vpack.c.b16 %v591, %v589
        %v610 = vpack.c.b16 %v592, %v590
        %v611 = vpack.c.b16 %v595, %v593
        %v612 = vpack.c.b16 %v596, %v594
        %629 = vmatpush.bf16.msra.mxu0 %v611
        %630 = vmatpush.bf16.msra.mxu0 %v609
        %631 = vmatpush.bf16.msra.mxu0 %v607
        %632 = vmatpush.bf16.msra.mxu0 %v605
        %633 = vmatpush.bf16.msra.mxu0 %v603
        %634 = vmatpush.bf16.msra.mxu0 %v601
        %635 = vmatpush.bf16.msra.mxu0 %v599
        %636 = vmatpush.bf16.msra.mxu0 %v597
        %637 = vmatmul.bf16.gmra.mxu0 %v525
        %v638 = vpop.f32.mrf.mxu0
        %v639 = vadd.f32 0.0, %v638
        %v640 = vpop.f32.mrf.mxu0
        %v641 = vadd.f32 0.0, %v640
        %642 = vmatmul.bf16.gmra.mxu0 %v526
        %v643 = vpop.f32.mrf.mxu0
        %v644 = vadd.f32 0.0, %v643
        %v645 = vpop.f32.mrf.mxu0
        %v646 = vadd.f32 0.0, %v645
        %647 = vmatmul.bf16.gmra.mxu0 %v527
        %v648 = vpop.f32.mrf.mxu0
        %v649 = vadd.f32 0.0, %v648
        %v650 = vpop.f32.mrf.mxu0
        %v651 = vadd.f32 0.0, %v650
        %652 = vmatmul.bf16.gmra.mxu0 %v528
        %v653 = vpop.f32.mrf.mxu0
        %v654 = vadd.f32 0.0, %v653
        %v655 = vpop.f32.mrf.mxu0
        %v656 = vadd.f32 0.0, %v655
        %657 = vmatmul.bf16.gmra.mxu0 %v529
        %v658 = vpop.f32.mrf.mxu0
        %v659 = vadd.f32 0.0, %v658
        %v660 = vpop.f32.mrf.mxu0
        %v661 = vadd.f32 0.0, %v660
        %662 = vmatmul.bf16.gmra.mxu0 %v530
        %v663 = vpop.f32.mrf.mxu0
        %v664 = vadd.f32 0.0, %v663
        %v665 = vpop.f32.mrf.mxu0
        %v666 = vadd.f32 0.0, %v665
        %667 = vmatmul.bf16.gmra.mxu0 %v531
        %v668 = vpop.f32.mrf.mxu0
        %v669 = vadd.f32 0.0, %v668
        %v670 = vpop.f32.mrf.mxu0
        %v671 = vadd.f32 0.0, %v670
        %672 = vmatmul.bf16.gmra.mxu0 %v532
        %v673 = vpop.f32.mrf.mxu0
        %v674 = vadd.f32 0.0, %v673
        %v675 = vpop.f32.mrf.mxu0
        %v676 = vadd.f32 0.0, %v675
        %677 = vdwg.mxu0
        %678 = vmatpush.bf16.msra.mxu0 %v612
        %679 = vmatpush.bf16.msra.mxu0 %v610
        %680 = vmatpush.bf16.msra.mxu0 %v608
        %681 = vmatpush.bf16.msra.mxu0 %v606
        %682 = vmatpush.bf16.msra.mxu0 %v604
        %683 = vmatpush.bf16.msra.mxu0 %v602
        %684 = vmatpush.bf16.msra.mxu0 %v600
        %685 = vmatpush.bf16.msra.mxu0 %v598
        %686 = vmatmul.bf16.gmra.mxu0 %v525
        %v687 = vpop.f32.mrf.mxu0
        %v688 = vadd.f32 0.0, %v687
        %v689 = vpop.f32.mrf.mxu0
        %v690 = vadd.f32 0.0, %v689
        %691 = vmatmul.bf16.gmra.mxu0 %v526
        %v692 = vpop.f32.mrf.mxu0
        %v693 = vadd.f32 0.0, %v692
        %v694 = vpop.f32.mrf.mxu0
        %v695 = vadd.f32 0.0, %v694
        %696 = vmatmul.bf16.gmra.mxu0 %v527
        %v697 = vpop.f32.mrf.mxu0
        %v698 = vadd.f32 0.0, %v697
        %v699 = vpop.f32.mrf.mxu0
        %v700 = vadd.f32 0.0, %v699
        %701 = vmatmul.bf16.gmra.mxu0 %v528
        %v702 = vpop.f32.mrf.mxu0
        %v703 = vadd.f32 0.0, %v702
        %v704 = vpop.f32.mrf.mxu0
        %v705 = vadd.f32 0.0, %v704
        %706 = vmatmul.bf16.gmra.mxu0 %v529
        %v707 = vpop.f32.mrf.mxu0
        %v708 = vadd.f32 0.0, %v707
        %v709 = vpop.f32.mrf.mxu0
        %v710 = vadd.f32 0.0, %v709
        %711 = vmatmul.bf16.gmra.mxu0 %v530
        %v712 = vpop.f32.mrf.mxu0
        %v713 = vadd.f32 0.0, %v712
        %v714 = vpop.f32.mrf.mxu0
        %v715 = vadd.f32 0.0, %v714
        %716 = vmatmul.bf16.gmra.mxu0 %v531
        %v717 = vpop.f32.mrf.mxu0
        %v718 = vadd.f32 0.0, %v717
        %v719 = vpop.f32.mrf.mxu0
        %v720 = vadd.f32 0.0, %v719
        %721 = vmatmul.bf16.gmra.mxu0 %v532
        %v722 = vpop.f32.mrf.mxu0
        %v723 = vadd.f32 0.0, %v722
        %v724 = vpop.f32.mrf.mxu0
        %v725 = vadd.f32 0.0, %v724
        %726 = vdwg.mxu0
        %v727 = vld [vmem:[%s4] sm:$0xf]
        %v728 = vld [vmem:[%s4 + $0x4] sm:$0xf]
        %v729 = vld [vmem:[%s4 + $0x8] sm:$0xf]
        %v730 = vld [vmem:[%s4 + $0xc] sm:$0xf]
        %v731 = vld [vmem:[%s4 + $0x10] sm:$0xf]
        %v732 = vld [vmem:[%s4 + $0x14] sm:$0xf]
        %v733 = vld [vmem:[%s4 + $0x18] sm:$0xf]
        %v734 = vld [vmem:[%s4 + $0x1c] sm:$0xf]
        %v735 = vld [vmem:[%s4 + $0x20] sm:$0xf]
        %v736 = vld [vmem:[%s4 + $0x24] sm:$0xf]
        %v737 = vld [vmem:[%s4 + $0x28] sm:$0xf]
        %v738 = vld [vmem:[%s4 + $0x2c] sm:$0xf]
        %v739 = vld [vmem:[%s4 + $0x30] sm:$0xf]
        %v740 = vld [vmem:[%s4 + $0x34] sm:$0xf]
        %v741 = vld [vmem:[%s4 + $0x38] sm:$0xf]
        %v742 = vld [vmem:[%s4 + $0x3c] sm:$0xf]
        %v743 = vld [vmem:[%s4 + $0x40] sm:$0xf]
        %v744 = vld [vmem:[%s4 + $0x44] sm:$0xf]
        %v745 = vld [vmem:[%s4 + $0x48] sm:$0xf]
        %v746 = vld [vmem:[%s4 + $0x4c] sm:$0xf]
        %v747 = vld [vmem:[%s4 + $0x50] sm:$0xf]
        %v748 = vld [vmem:[%s4 + $0x54] sm:$0xf]
        %v749 = vld [vmem:[%s4 + $0x58] sm:$0xf]
        %v750 = vld [vmem:[%s4 + $0x5c] sm:$0xf]
        %v751 = vld [vmem:[%s4 + $0x60] sm:$0xf]
        %v752 = vld [vmem:[%s4 + $0x64] sm:$0xf]
        %v753 = vld [vmem:[%s4 + $0x68] sm:$0xf]
        %v754 = vld [vmem:[%s4 + $0x6c] sm:$0xf]
        %v755 = vld [vmem:[%s4 + $0x70] sm:$0xf]
        %v756 = vld [vmem:[%s4 + $0x74] sm:$0xf]
        %v757 = vld [vmem:[%s4 + $0x78] sm:$0xf]
        %v758 = vld [vmem:[%s4 + $0x7c] sm:$0xf]
        %v759 = vpack.c.bf16 %v641, %v639
        %v760 = vpack.c.bf16 %v690, %v688
        %v761 = vpack.c.bf16 %v646, %v644
        %v762 = vpack.c.bf16 %v695, %v693
        %v763 = vpack.c.bf16 %v651, %v649
        %v764 = vpack.c.bf16 %v700, %v698
        %v765 = vpack.c.bf16 %v656, %v654
        %v766 = vpack.c.bf16 %v705, %v703
        %v767 = vpack.c.bf16 %v661, %v659
        %v768 = vpack.c.bf16 %v710, %v708
        %v769 = vpack.c.bf16 %v666, %v664
        %v770 = vpack.c.bf16 %v715, %v713
        %v771 = vpack.c.bf16 %v671, %v669
        %v772 = vpack.c.bf16 %v720, %v718
        %v773 = vpack.c.bf16 %v676, %v674
        %v774 = vpack.c.bf16 %v725, %v723
        %v807 = vunpack.c.l.b16 %v727
        %v808 = vunpack.c.l.b16 %v728
        %v809 = vunpack.c.l.b16 %v729
        %v810 = vunpack.c.l.b16 %v730
        %v811 = vunpack.c.l.b16 %v731
        %v812 = vunpack.c.l.b16 %v732
        %v813 = vunpack.c.l.b16 %v733
        %v814 = vunpack.c.l.b16 %v734
        %v815 = vunpack.c.l.b16 %v735
        %v816 = vunpack.c.l.b16 %v736
        %v817 = vunpack.c.l.b16 %v737
        %v818 = vunpack.c.l.b16 %v738
        %v819 = vunpack.c.l.b16 %v739
        %v820 = vunpack.c.l.b16 %v740
        %v821 = vunpack.c.l.b16 %v741
        %v822 = vunpack.c.l.b16 %v742
        %v823 = vunpack.c.l.b16 %v743
        %v824 = vunpack.c.l.b16 %v744
        %v825 = vunpack.c.l.b16 %v745
        %v826 = vunpack.c.l.b16 %v746
        %v827 = vunpack.c.l.b16 %v747
        %v828 = vunpack.c.l.b16 %v748
        %v829 = vunpack.c.l.b16 %v749
        %v830 = vunpack.c.l.b16 %v750
        %v831 = vunpack.c.l.b16 %v751
        %v832 = vunpack.c.l.b16 %v752
        %v833 = vunpack.c.l.b16 %v753
        %v834 = vunpack.c.l.b16 %v754
        %v835 = vunpack.c.l.b16 %v755
        %v836 = vunpack.c.l.b16 %v756
        %v837 = vunpack.c.l.b16 %v757
        %v838 = vunpack.c.l.b16 %v758
        %v839 = vpack.c.b16 %v808, %v807
        %v840 = vpack.c.b16 %v810, %v809
        %v841 = vpack.c.b16 %v812, %v811
        %v842 = vpack.c.b16 %v814, %v813
        %v843 = vpack.c.b16 %v816, %v815
        %v844 = vpack.c.b16 %v818, %v817
        %v845 = vpack.c.b16 %v820, %v819
        %v846 = vpack.c.b16 %v822, %v821
        %v847 = vpack.c.b16 %v824, %v823
        %v848 = vpack.c.b16 %v826, %v825
        %v849 = vpack.c.b16 %v828, %v827
        %v850 = vpack.c.b16 %v830, %v829
        %v851 = vpack.c.b16 %v832, %v831
        %v852 = vpack.c.b16 %v834, %v833
        %v853 = vpack.c.b16 %v836, %v835
        %v854 = vpack.c.b16 %v838, %v837
        %871 = vmatpush.bf16.msra.mxu0 %v773
        %872 = vmatpush.bf16.msra.mxu0 %v771
        %873 = vmatpush.bf16.msra.mxu0 %v769
        %874 = vmatpush.bf16.msra.mxu0 %v767
        %875 = vmatpush.bf16.msra.mxu0 %v765
        %876 = vmatpush.bf16.msra.mxu0 %v763
        %877 = vmatpush.bf16.msra.mxu0 %v761
        %878 = vmatpush.bf16.msra.mxu0 %v759
        %879 = vmatmul.bf16.gmra.mxu0 %v839
        %v880 = vpop.f32.mrf.mxu0
        %v881 = vadd.f32 0.0, %v880
        %v882 = vpop.f32.mrf.mxu0
        %v883 = vadd.f32 0.0, %v882
        %884 = vmatmul.bf16.gmra.mxu0 %v840
        %v885 = vpop.f32.mrf.mxu0
        %v886 = vadd.f32 0.0, %v885
        %v887 = vpop.f32.mrf.mxu0
        %v888 = vadd.f32 0.0, %v887
        %889 = vmatmul.bf16.gmra.mxu0 %v841
        %v890 = vpop.f32.mrf.mxu0
        %v891 = vadd.f32 0.0, %v890
        %v892 = vpop.f32.mrf.mxu0
        %v893 = vadd.f32 0.0, %v892
        %894 = vmatmul.bf16.gmra.mxu0 %v842
        %v895 = vpop.f32.mrf.mxu0
        %v896 = vadd.f32 0.0, %v895
        %v897 = vpop.f32.mrf.mxu0
        %v898 = vadd.f32 0.0, %v897
        %899 = vmatmul.bf16.gmra.mxu0 %v843
        %v900 = vpop.f32.mrf.mxu0
        %v901 = vadd.f32 0.0, %v900
        %v902 = vpop.f32.mrf.mxu0
        %v903 = vadd.f32 0.0, %v902
        %904 = vmatmul.bf16.gmra.mxu0 %v844
        %v905 = vpop.f32.mrf.mxu0
        %v906 = vadd.f32 0.0, %v905
        %v907 = vpop.f32.mrf.mxu0
        %v908 = vadd.f32 0.0, %v907
        %909 = vmatmul.bf16.gmra.mxu0 %v845
        %v910 = vpop.f32.mrf.mxu0
        %v911 = vadd.f32 0.0, %v910
        %v912 = vpop.f32.mrf.mxu0
        %v913 = vadd.f32 0.0, %v912
        %914 = vmatmul.bf16.gmra.mxu0 %v846
        %v915 = vpop.f32.mrf.mxu0
        %v916 = vadd.f32 0.0, %v915
        %v917 = vpop.f32.mrf.mxu0
        %v918 = vadd.f32 0.0, %v917
        %919 = vmatmul.bf16.gmra.mxu0 %v847
        %v920 = vpop.f32.mrf.mxu0
        %v921 = vadd.f32 0.0, %v920
        %v922 = vpop.f32.mrf.mxu0
        %v923 = vadd.f32 0.0, %v922
        %924 = vmatmul.bf16.gmra.mxu0 %v848
        %v925 = vpop.f32.mrf.mxu0
        %v926 = vadd.f32 0.0, %v925
        %v927 = vpop.f32.mrf.mxu0
        %v928 = vadd.f32 0.0, %v927
        %929 = vmatmul.bf16.gmra.mxu0 %v849
        %v930 = vpop.f32.mrf.mxu0
        %v931 = vadd.f32 0.0, %v930
        %v932 = vpop.f32.mrf.mxu0
        %v933 = vadd.f32 0.0, %v932
        %934 = vmatmul.bf16.gmra.mxu0 %v850
        %v935 = vpop.f32.mrf.mxu0
        %v936 = vadd.f32 0.0, %v935
        %v937 = vpop.f32.mrf.mxu0
        %v938 = vadd.f32 0.0, %v937
        %939 = vmatmul.bf16.gmra.mxu0 %v851
        %v940 = vpop.f32.mrf.mxu0
        %v941 = vadd.f32 0.0, %v940
        %v942 = vpop.f32.mrf.mxu0
        %v943 = vadd.f32 0.0, %v942
        %944 = vmatmul.bf16.gmra.mxu0 %v852
        %v945 = vpop.f32.mrf.mxu0
        %v946 = vadd.f32 0.0, %v945
        %v947 = vpop.f32.mrf.mxu0
        %v948 = vadd.f32 0.0, %v947
        %949 = vmatmul.bf16.gmra.mxu0 %v853
        %v950 = vpop.f32.mrf.mxu0
        %v951 = vadd.f32 0.0, %v950
        %v952 = vpop.f32.mrf.mxu0
        %v953 = vadd.f32 0.0, %v952
        %954 = vmatmul.bf16.gmra.mxu0 %v854
        %v955 = vpop.f32.mrf.mxu0
        %v956 = vadd.f32 0.0, %v955
        %v957 = vpop.f32.mrf.mxu0
        %v958 = vadd.f32 0.0, %v957
        %959 = vdwg.mxu0
        %960 = vmatpush.bf16.msra.mxu0 %v774
        %961 = vmatpush.bf16.msra.mxu0 %v772
        %962 = vmatpush.bf16.msra.mxu0 %v770
        %963 = vmatpush.bf16.msra.mxu0 %v768
        %964 = vmatpush.bf16.msra.mxu0 %v766
        %965 = vmatpush.bf16.msra.mxu0 %v764
        %966 = vmatpush.bf16.msra.mxu0 %v762
        %967 = vmatpush.bf16.msra.mxu0 %v760
        %968 = vmatmul.bf16.gmra.mxu0 %v839
        %v969 = vpop.f32.mrf.mxu0
        %v970 = vadd.f32 0.0, %v969
        %v971 = vpop.f32.mrf.mxu0
        %v972 = vadd.f32 0.0, %v971
        %973 = vmatmul.bf16.gmra.mxu0 %v840
        %v974 = vpop.f32.mrf.mxu0
        %v975 = vadd.f32 0.0, %v974
        %v976 = vpop.f32.mrf.mxu0
        %v977 = vadd.f32 0.0, %v976
        %978 = vmatmul.bf16.gmra.mxu0 %v841
        %v979 = vpop.f32.mrf.mxu0
        %v980 = vadd.f32 0.0, %v979
        %v981 = vpop.f32.mrf.mxu0
        %v982 = vadd.f32 0.0, %v981
        %983 = vmatmul.bf16.gmra.mxu0 %v842
        %v984 = vpop.f32.mrf.mxu0
        %v985 = vadd.f32 0.0, %v984
        %v986 = vpop.f32.mrf.mxu0
        %v987 = vadd.f32 0.0, %v986
        %988 = vmatmul.bf16.gmra.mxu0 %v843
        %v989 = vpop.f32.mrf.mxu0
        %v990 = vadd.f32 0.0, %v989
        %v991 = vpop.f32.mrf.mxu0
        %v992 = vadd.f32 0.0, %v991
        %993 = vmatmul.bf16.gmra.mxu0 %v844
        %v994 = vpop.f32.mrf.mxu0
        %v995 = vadd.f32 0.0, %v994
        %v996 = vpop.f32.mrf.mxu0
        %v997 = vadd.f32 0.0, %v996
        %998 = vmatmul.bf16.gmra.mxu0 %v845
        %v999 = vpop.f32.mrf.mxu0
        %v1000 = vadd.f32 0.0, %v999
        %v1001 = vpop.f32.mrf.mxu0
        %v1002 = vadd.f32 0.0, %v1001
        %1003 = vmatmul.bf16.gmra.mxu0 %v846
        %v1004 = vpop.f32.mrf.mxu0
        %v1005 = vadd.f32 0.0, %v1004
        %v1006 = vpop.f32.mrf.mxu0
        %v1007 = vadd.f32 0.0, %v1006
        %1008 = vmatmul.bf16.gmra.mxu0 %v847
        %v1009 = vpop.f32.mrf.mxu0
        %v1010 = vadd.f32 0.0, %v1009
        %v1011 = vpop.f32.mrf.mxu0
        %v1012 = vadd.f32 0.0, %v1011
        %1013 = vmatmul.bf16.gmra.mxu0 %v848
        %v1014 = vpop.f32.mrf.mxu0
        %v1015 = vadd.f32 0.0, %v1014
        %v1016 = vpop.f32.mrf.mxu0
        %v1017 = vadd.f32 0.0, %v1016
        %1018 = vmatmul.bf16.gmra.mxu0 %v849
        %v1019 = vpop.f32.mrf.mxu0
        %v1020 = vadd.f32 0.0, %v1019
        %v1021 = vpop.f32.mrf.mxu0
        %v1022 = vadd.f32 0.0, %v1021
        %1023 = vmatmul.bf16.gmra.mxu0 %v850
        %v1024 = vpop.f32.mrf.mxu0
        %v1025 = vadd.f32 0.0, %v1024
        %v1026 = vpop.f32.mrf.mxu0
        %v1027 = vadd.f32 0.0, %v1026
        %1028 = vmatmul.bf16.gmra.mxu0 %v851
        %v1029 = vpop.f32.mrf.mxu0
        %v1030 = vadd.f32 0.0, %v1029
        %v1031 = vpop.f32.mrf.mxu0
        %v1032 = vadd.f32 0.0, %v1031
        %1033 = vmatmul.bf16.gmra.mxu0 %v852
        %v1034 = vpop.f32.mrf.mxu0
        %v1035 = vadd.f32 0.0, %v1034
        %v1036 = vpop.f32.mrf.mxu0
        %v1037 = vadd.f32 0.0, %v1036
        %1038 = vmatmul.bf16.gmra.mxu0 %v853
        %v1039 = vpop.f32.mrf.mxu0
        %v1040 = vadd.f32 0.0, %v1039
        %v1041 = vpop.f32.mrf.mxu0
        %v1042 = vadd.f32 0.0, %v1041
        %1043 = vmatmul.bf16.gmra.mxu0 %v854
        %v1044 = vpop.f32.mrf.mxu0
        %v1045 = vadd.f32 0.0, %v1044
        %v1046 = vpop.f32.mrf.mxu0
        %v1047 = vadd.f32 0.0, %v1046
        %1048 = vdwg.mxu0
        %v1049 = vsub.f32 %v881, %v1010
        %v1050 = vsub.f32 %v883, %v1012
        %v1051 = vsub.f32 %v886, %v1015
        %v1052 = vsub.f32 %v888, %v1017
        %v1053 = vsub.f32 %v891, %v1020
        %v1054 = vsub.f32 %v893, %v1022
        %v1055 = vsub.f32 %v896, %v1025
        %v1056 = vsub.f32 %v898, %v1027
        %v1057 = vsub.f32 %v901, %v1030
        %v1058 = vsub.f32 %v903, %v1032
        %v1059 = vsub.f32 %v906, %v1035
        %v1060 = vsub.f32 %v908, %v1037
        %v1061 = vsub.f32 %v911, %v1040
        %v1062 = vsub.f32 %v913, %v1042
        %v1063 = vsub.f32 %v916, %v1045
        %v1064 = vsub.f32 %v918, %v1047
        %v1065 = vadd.f32 %v970, %v921
        %v1066 = vadd.f32 %v972, %v923
        %v1067 = vadd.f32 %v975, %v926
        %v1068 = vadd.f32 %v977, %v928
        %v1069 = vadd.f32 %v980, %v931
        %v1070 = vadd.f32 %v982, %v933
        %v1071 = vadd.f32 %v985, %v936
        %v1072 = vadd.f32 %v987, %v938
        %v1073 = vadd.f32 %v990, %v941
        %v1074 = vadd.f32 %v992, %v943
        %v1075 = vadd.f32 %v995, %v946
        %v1076 = vadd.f32 %v997, %v948
        %v1077 = vadd.f32 %v1000, %v951
        %v1078 = vadd.f32 %v1002, %v953
        %v1079 = vadd.f32 %v1005, %v956
        %v1080 = vadd.f32 %v1007, %v958
        %v1081 = vmul.f32 %v1049, %v1049
        %v1082 = vmul.f32 %v1050, %v1050
        %v1083 = vmul.f32 %v1051, %v1051
        %v1084 = vmul.f32 %v1052, %v1052
        %v1085 = vmul.f32 %v1053, %v1053
        %v1086 = vmul.f32 %v1054, %v1054
        %v1087 = vmul.f32 %v1055, %v1055
        %v1088 = vmul.f32 %v1056, %v1056
        %v1089 = vmul.f32 %v1057, %v1057
        %v1090 = vmul.f32 %v1058, %v1058
        %v1091 = vmul.f32 %v1059, %v1059
        %v1092 = vmul.f32 %v1060, %v1060
        %v1093 = vmul.f32 %v1061, %v1061
        %v1094 = vmul.f32 %v1062, %v1062
        %v1095 = vmul.f32 %v1063, %v1063
        %v1096 = vmul.f32 %v1064, %v1064
        %v1097 = vmul.f32 %v1065, %v1065
        %v1098 = vmul.f32 %v1066, %v1066
        %v1099 = vmul.f32 %v1067, %v1067
        %v1100 = vmul.f32 %v1068, %v1068
        %v1101 = vmul.f32 %v1069, %v1069
        %v1102 = vmul.f32 %v1070, %v1070
        %v1103 = vmul.f32 %v1071, %v1071
        %v1104 = vmul.f32 %v1072, %v1072
        %v1105 = vmul.f32 %v1073, %v1073
        %v1106 = vmul.f32 %v1074, %v1074
        %v1107 = vmul.f32 %v1075, %v1075
        %v1108 = vmul.f32 %v1076, %v1076
        %v1109 = vmul.f32 %v1077, %v1077
        %v1110 = vmul.f32 %v1078, %v1078
        %v1111 = vmul.f32 %v1079, %v1079
        %v1112 = vmul.f32 %v1080, %v1080
        %v1113 = vadd.f32 %v1081, %v1097
        %v1114 = vadd.f32 %v1082, %v1098
        %v1115 = vadd.f32 %v1083, %v1099
        %v1116 = vadd.f32 %v1084, %v1100
        %v1117 = vadd.f32 %v1085, %v1101
        %v1118 = vadd.f32 %v1086, %v1102
        %v1119 = vadd.f32 %v1087, %v1103
        %v1120 = vadd.f32 %v1088, %v1104
        %v1121 = vadd.f32 %v1089, %v1105
        %v1122 = vadd.f32 %v1090, %v1106
        %v1123 = vadd.f32 %v1091, %v1107
        %v1124 = vadd.f32 %v1092, %v1108
        %v1125 = vadd.f32 %v1093, %v1109
        %v1126 = vadd.f32 %v1094, %v1110
        %v1127 = vadd.f32 %v1095, %v1111
        %v1128 = vadd.f32 %v1096, %v1112
        %v1129 = vrsqrt.pop %v1113
        %v1130 = vmul.f32 %v1129, %v1113
        %v1131 = vmul.f32 %v1130, %v1129
        %v1132 = vmul.f32 0.5, %v1131
        %v1133 = vsub.f32 1.5, %v1132
        %v1134 = vmul.f32 %v1129, %v1133
        %v1135 = vmul.f32 %v1113, %v1134
        %vm1136 = vcmp.eq.f32.partialorder %v1113, inf
        %v1137 = vsel %vm1136, %v1113, %v1135
        %vm1138 = vcmp.eq.f32.partialorder %v1113, 0.0
        %v1139 = vand.u32 %v1113, 2147483648
        %v1140 = vsel %vm1138, %v1139, %v1137
        %v1141 = vrsqrt.pop %v1114
        %v1142 = vmul.f32 %v1141, %v1114
        %v1143 = vmul.f32 %v1142, %v1141
        %v1144 = vmul.f32 0.5, %v1143
        %v1145 = vsub.f32 1.5, %v1144
        %v1146 = vmul.f32 %v1141, %v1145
        %v1147 = vmul.f32 %v1114, %v1146
        %vm1148 = vcmp.eq.f32.partialorder %v1114, inf
        %v1149 = vsel %vm1148, %v1114, %v1147
        %vm1150 = vcmp.eq.f32.partialorder %v1114, 0.0
        %v1151 = vand.u32 %v1114, 2147483648
        %v1152 = vsel %vm1150, %v1151, %v1149
        %v1153 = vrsqrt.pop %v1115
        %v1154 = vmul.f32 %v1153, %v1115
        %v1155 = vmul.f32 %v1154, %v1153
        %v1156 = vmul.f32 0.5, %v1155
        %v1157 = vsub.f32 1.5, %v1156
        %v1158 = vmul.f32 %v1153, %v1157
        %v1159 = vmul.f32 %v1115, %v1158
        %vm1160 = vcmp.eq.f32.partialorder %v1115, inf
        %v1161 = vsel %vm1160, %v1115, %v1159
        %vm1162 = vcmp.eq.f32.partialorder %v1115, 0.0
        %v1163 = vand.u32 %v1115, 2147483648
        %v1164 = vsel %vm1162, %v1163, %v1161
        %v1165 = vrsqrt.pop %v1116
        %v1166 = vmul.f32 %v1165, %v1116
        %v1167 = vmul.f32 %v1166, %v1165
        %v1168 = vmul.f32 0.5, %v1167
        %v1169 = vsub.f32 1.5, %v1168
        %v1170 = vmul.f32 %v1165, %v1169
        %v1171 = vmul.f32 %v1116, %v1170
        %vm1172 = vcmp.eq.f32.partialorder %v1116, inf
        %v1173 = vsel %vm1172, %v1116, %v1171
        %vm1174 = vcmp.eq.f32.partialorder %v1116, 0.0
        %v1175 = vand.u32 %v1116, 2147483648
        %v1176 = vsel %vm1174, %v1175, %v1173
        %v1177 = vrsqrt.pop %v1117
        %v1178 = vmul.f32 %v1177, %v1117
        %v1179 = vmul.f32 %v1178, %v1177
        %v1180 = vmul.f32 0.5, %v1179
        %v1181 = vsub.f32 1.5, %v1180
        %v1182 = vmul.f32 %v1177, %v1181
        %v1183 = vmul.f32 %v1117, %v1182
        %vm1184 = vcmp.eq.f32.partialorder %v1117, inf
        %v1185 = vsel %vm1184, %v1117, %v1183
        %vm1186 = vcmp.eq.f32.partialorder %v1117, 0.0
        %v1187 = vand.u32 %v1117, 2147483648
        %v1188 = vsel %vm1186, %v1187, %v1185
        %v1189 = vrsqrt.pop %v1118
        %v1190 = vmul.f32 %v1189, %v1118
        %v1191 = vmul.f32 %v1190, %v1189
        %v1192 = vmul.f32 0.5, %v1191
        %v1193 = vsub.f32 1.5, %v1192
        %v1194 = vmul.f32 %v1189, %v1193
        %v1195 = vmul.f32 %v1118, %v1194
        %vm1196 = vcmp.eq.f32.partialorder %v1118, inf
        %v1197 = vsel %vm1196, %v1118, %v1195
        %vm1198 = vcmp.eq.f32.partialorder %v1118, 0.0
        %v1199 = vand.u32 %v1118, 2147483648
        %v1200 = vsel %vm1198, %v1199, %v1197
        %v1201 = vrsqrt.pop %v1119
        %v1202 = vmul.f32 %v1201, %v1119
        %v1203 = vmul.f32 %v1202, %v1201
        %v1204 = vmul.f32 0.5, %v1203
        %v1205 = vsub.f32 1.5, %v1204
        %v1206 = vmul.f32 %v1201, %v1205
        %v1207 = vmul.f32 %v1119, %v1206
        %vm1208 = vcmp.eq.f32.partialorder %v1119, inf
        %v1209 = vsel %vm1208, %v1119, %v1207
        %vm1210 = vcmp.eq.f32.partialorder %v1119, 0.0
        %v1211 = vand.u32 %v1119, 2147483648
        %v1212 = vsel %vm1210, %v1211, %v1209
        %v1213 = vrsqrt.pop %v1120
        %v1214 = vmul.f32 %v1213, %v1120
        %v1215 = vmul.f32 %v1214, %v1213
        %v1216 = vmul.f32 0.5, %v1215
        %v1217 = vsub.f32 1.5, %v1216
        %v1218 = vmul.f32 %v1213, %v1217
        %v1219 = vmul.f32 %v1120, %v1218
        %vm1220 = vcmp.eq.f32.partialorder %v1120, inf
        %v1221 = vsel %vm1220, %v1120, %v1219
        %vm1222 = vcmp.eq.f32.partialorder %v1120, 0.0
        %v1223 = vand.u32 %v1120, 2147483648
        %v1224 = vsel %vm1222, %v1223, %v1221
        %v1225 = vrsqrt.pop %v1121
        %v1226 = vmul.f32 %v1225, %v1121
        %v1227 = vmul.f32 %v1226, %v1225
        %v1228 = vmul.f32 0.5, %v1227
        %v1229 = vsub.f32 1.5, %v1228
        %v1230 = vmul.f32 %v1225, %v1229
        %v1231 = vmul.f32 %v1121, %v1230
        %vm1232 = vcmp.eq.f32.partialorder %v1121, inf
        %v1233 = vsel %vm1232, %v1121, %v1231
        %vm1234 = vcmp.eq.f32.partialorder %v1121, 0.0
        %v1235 = vand.u32 %v1121, 2147483648
        %v1236 = vsel %vm1234, %v1235, %v1233
        %v1237 = vrsqrt.pop %v1122
        %v1238 = vmul.f32 %v1237, %v1122
        %v1239 = vmul.f32 %v1238, %v1237
        %v1240 = vmul.f32 0.5, %v1239
        %v1241 = vsub.f32 1.5, %v1240
        %v1242 = vmul.f32 %v1237, %v1241
        %v1243 = vmul.f32 %v1122, %v1242
        %vm1244 = vcmp.eq.f32.partialorder %v1122, inf
        %v1245 = vsel %vm1244, %v1122, %v1243
        %vm1246 = vcmp.eq.f32.partialorder %v1122, 0.0
        %v1247 = vand.u32 %v1122, 2147483648
        %v1248 = vsel %vm1246, %v1247, %v1245
        %v1249 = vrsqrt.pop %v1123
        %v1250 = vmul.f32 %v1249, %v1123
        %v1251 = vmul.f32 %v1250, %v1249
        %v1252 = vmul.f32 0.5, %v1251
        %v1253 = vsub.f32 1.5, %v1252
        %v1254 = vmul.f32 %v1249, %v1253
        %v1255 = vmul.f32 %v1123, %v1254
        %vm1256 = vcmp.eq.f32.partialorder %v1123, inf
        %v1257 = vsel %vm1256, %v1123, %v1255
        %vm1258 = vcmp.eq.f32.partialorder %v1123, 0.0
        %v1259 = vand.u32 %v1123, 2147483648
        %v1260 = vsel %vm1258, %v1259, %v1257
        %v1261 = vrsqrt.pop %v1124
        %v1262 = vmul.f32 %v1261, %v1124
        %v1263 = vmul.f32 %v1262, %v1261
        %v1264 = vmul.f32 0.5, %v1263
        %v1265 = vsub.f32 1.5, %v1264
        %v1266 = vmul.f32 %v1261, %v1265
        %v1267 = vmul.f32 %v1124, %v1266
        %vm1268 = vcmp.eq.f32.partialorder %v1124, inf
        %v1269 = vsel %vm1268, %v1124, %v1267
        %vm1270 = vcmp.eq.f32.partialorder %v1124, 0.0
        %v1271 = vand.u32 %v1124, 2147483648
        %v1272 = vsel %vm1270, %v1271, %v1269
        %v1273 = vrsqrt.pop %v1125
        %v1274 = vmul.f32 %v1273, %v1125
        %v1275 = vmul.f32 %v1274, %v1273
        %v1276 = vmul.f32 0.5, %v1275
        %v1277 = vsub.f32 1.5, %v1276
        %v1278 = vmul.f32 %v1273, %v1277
        %v1279 = vmul.f32 %v1125, %v1278
        %vm1280 = vcmp.eq.f32.partialorder %v1125, inf
        %v1281 = vsel %vm1280, %v1125, %v1279
        %vm1282 = vcmp.eq.f32.partialorder %v1125, 0.0
        %v1283 = vand.u32 %v1125, 2147483648
        %v1284 = vsel %vm1282, %v1283, %v1281
        %v1285 = vrsqrt.pop %v1126
        %v1286 = vmul.f32 %v1285, %v1126
        %v1287 = vmul.f32 %v1286, %v1285
        %v1288 = vmul.f32 0.5, %v1287
        %v1289 = vsub.f32 1.5, %v1288
        %v1290 = vmul.f32 %v1285, %v1289
        %v1291 = vmul.f32 %v1126, %v1290
        %vm1292 = vcmp.eq.f32.partialorder %v1126, inf
        %v1293 = vsel %vm1292, %v1126, %v1291
        %vm1294 = vcmp.eq.f32.partialorder %v1126, 0.0
        %v1295 = vand.u32 %v1126, 2147483648
        %v1296 = vsel %vm1294, %v1295, %v1293
        %v1297 = vrsqrt.pop %v1127
        %v1298 = vmul.f32 %v1297, %v1127
        %v1299 = vmul.f32 %v1298, %v1297
        %v1300 = vmul.f32 0.5, %v1299
        %v1301 = vsub.f32 1.5, %v1300
        %v1302 = vmul.f32 %v1297, %v1301
        %v1303 = vmul.f32 %v1127, %v1302
        %vm1304 = vcmp.eq.f32.partialorder %v1127, inf
        %v1305 = vsel %vm1304, %v1127, %v1303
        %vm1306 = vcmp.eq.f32.partialorder %v1127, 0.0
        %v1307 = vand.u32 %v1127, 2147483648
        %v1308 = vsel %vm1306, %v1307, %v1305
        %v1309 = vrsqrt.pop %v1128
        %v1310 = vmul.f32 %v1309, %v1128
        %v1311 = vmul.f32 %v1310, %v1309
        %v1312 = vmul.f32 0.5, %v1311
        %v1313 = vsub.f32 1.5, %v1312
        %v1314 = vmul.f32 %v1309, %v1313
        %v1315 = vmul.f32 %v1128, %v1314
        %vm1316 = vcmp.eq.f32.partialorder %v1128, inf
        %v1317 = vsel %vm1316, %v1128, %v1315
        %vm1318 = vcmp.eq.f32.partialorder %v1128, 0.0
        %v1319 = vand.u32 %v1128, 2147483648
        %v1320 = vsel %vm1318, %v1319, %v1317
        %v1321 = vadd.f32 %v1140, 1.0
        %v1322 = vlog2.pop %v1321
        %v1323 = vmul.f32 %v1322, 0.6931472
        %v1324 = vmul.f32 -0.5, %v1140
        %v1325 = vadd.f32 %v1324, 1.0
        %v1326 = vmul.f32 %v1325, %v1140
        %v1327 = vand.u32 2147483647, %v1140
        %vm1328 = vcmp.lt.f32.partialorder %v1327, 0.0004427343
        %v1329 = vsel %vm1328, %v1326, %v1323
        %v1330 = vadd.f32 %v1152, 1.0
        %v1331 = vlog2.pop %v1330
        %v1332 = vmul.f32 %v1331, 0.6931472
        %v1333 = vmul.f32 -0.5, %v1152
        %v1334 = vadd.f32 %v1333, 1.0
        %v1335 = vmul.f32 %v1334, %v1152
        %v1336 = vand.u32 2147483647, %v1152
        %vm1337 = vcmp.lt.f32.partialorder %v1336, 0.0004427343
        %v1338 = vsel %vm1337, %v1335, %v1332
        %v1339 = vadd.f32 %v1164, 1.0
        %v1340 = vlog2.pop %v1339
        %v1341 = vmul.f32 %v1340, 0.6931472
        %v1342 = vmul.f32 -0.5, %v1164
        %v1343 = vadd.f32 %v1342, 1.0
        %v1344 = vmul.f32 %v1343, %v1164
        %v1345 = vand.u32 2147483647, %v1164
        %vm1346 = vcmp.lt.f32.partialorder %v1345, 0.0004427343
        %v1347 = vsel %vm1346, %v1344, %v1341
        %v1348 = vadd.f32 %v1176, 1.0
        %v1349 = vlog2.pop %v1348
        %v1350 = vmul.f32 %v1349, 0.6931472
        %v1351 = vmul.f32 -0.5, %v1176
        %v1352 = vadd.f32 %v1351, 1.0
        %v1353 = vmul.f32 %v1352, %v1176
        %v1354 = vand.u32 2147483647, %v1176
        %vm1355 = vcmp.lt.f32.partialorder %v1354, 0.0004427343
        %v1356 = vsel %vm1355, %v1353, %v1350
        %v1357 = vadd.f32 %v1188, 1.0
        %v1358 = vlog2.pop %v1357
        %v1359 = vmul.f32 %v1358, 0.6931472
        %v1360 = vmul.f32 -0.5, %v1188
        %v1361 = vadd.f32 %v1360, 1.0
        %v1362 = vmul.f32 %v1361, %v1188
        %v1363 = vand.u32 2147483647, %v1188
        %vm1364 = vcmp.lt.f32.partialorder %v1363, 0.0004427343
        %v1365 = vsel %vm1364, %v1362, %v1359
        %v1366 = vadd.f32 %v1200, 1.0
        %v1367 = vlog2.pop %v1366
        %v1368 = vmul.f32 %v1367, 0.6931472
        %v1369 = vmul.f32 -0.5, %v1200
        %v1370 = vadd.f32 %v1369, 1.0
        %v1371 = vmul.f32 %v1370, %v1200
        %v1372 = vand.u32 2147483647, %v1200
        %vm1373 = vcmp.lt.f32.partialorder %v1372, 0.0004427343
        %v1374 = vsel %vm1373, %v1371, %v1368
        %v1375 = vadd.f32 %v1212, 1.0
        %v1376 = vlog2.pop %v1375
        %v1377 = vmul.f32 %v1376, 0.6931472
        %v1378 = vmul.f32 -0.5, %v1212
        %v1379 = vadd.f32 %v1378, 1.0
        %v1380 = vmul.f32 %v1379, %v1212
        %v1381 = vand.u32 2147483647, %v1212
        %vm1382 = vcmp.lt.f32.partialorder %v1381, 0.0004427343
        %v1383 = vsel %vm1382, %v1380, %v1377
        %v1384 = vadd.f32 %v1224, 1.0
        %v1385 = vlog2.pop %v1384
        %v1386 = vmul.f32 %v1385, 0.6931472
        %v1387 = vmul.f32 -0.5, %v1224
        %v1388 = vadd.f32 %v1387, 1.0
        %v1389 = vmul.f32 %v1388, %v1224
        %v1390 = vand.u32 2147483647, %v1224
        %vm1391 = vcmp.lt.f32.partialorder %v1390, 0.0004427343
        %v1392 = vsel %vm1391, %v1389, %v1386
        %v1393 = vadd.f32 %v1236, 1.0
        %v1394 = vlog2.pop %v1393
        %v1395 = vmul.f32 %v1394, 0.6931472
        %v1396 = vmul.f32 -0.5, %v1236
        %v1397 = vadd.f32 %v1396, 1.0
        %v1398 = vmul.f32 %v1397, %v1236
        %v1399 = vand.u32 2147483647, %v1236
        %vm1400 = vcmp.lt.f32.partialorder %v1399, 0.0004427343
        %v1401 = vsel %vm1400, %v1398, %v1395
        %v1402 = vadd.f32 %v1248, 1.0
        %v1403 = vlog2.pop %v1402
        %v1404 = vmul.f32 %v1403, 0.6931472
        %v1405 = vmul.f32 -0.5, %v1248
        %v1406 = vadd.f32 %v1405, 1.0
        %v1407 = vmul.f32 %v1406, %v1248
        %v1408 = vand.u32 2147483647, %v1248
        %vm1409 = vcmp.lt.f32.partialorder %v1408, 0.0004427343
        %v1410 = vsel %vm1409, %v1407, %v1404
        %v1411 = vadd.f32 %v1260, 1.0
        %v1412 = vlog2.pop %v1411
        %v1413 = vmul.f32 %v1412, 0.6931472
        %v1414 = vmul.f32 -0.5, %v1260
        %v1415 = vadd.f32 %v1414, 1.0
        %v1416 = vmul.f32 %v1415, %v1260
        %v1417 = vand.u32 2147483647, %v1260
        %vm1418 = vcmp.lt.f32.partialorder %v1417, 0.0004427343
        %v1419 = vsel %vm1418, %v1416, %v1413
        %v1420 = vadd.f32 %v1272, 1.0
        %v1421 = vlog2.pop %v1420
        %v1422 = vmul.f32 %v1421, 0.6931472
        %v1423 = vmul.f32 -0.5, %v1272
        %v1424 = vadd.f32 %v1423, 1.0
        %v1425 = vmul.f32 %v1424, %v1272
        %v1426 = vand.u32 2147483647, %v1272
        %vm1427 = vcmp.lt.f32.partialorder %v1426, 0.0004427343
        %v1428 = vsel %vm1427, %v1425, %v1422
        %v1429 = vadd.f32 %v1284, 1.0
        %v1430 = vlog2.pop %v1429
        %v1431 = vmul.f32 %v1430, 0.6931472
        %v1432 = vmul.f32 -0.5, %v1284
        %v1433 = vadd.f32 %v1432, 1.0
        %v1434 = vmul.f32 %v1433, %v1284
        %v1435 = vand.u32 2147483647, %v1284
        %vm1436 = vcmp.lt.f32.partialorder %v1435, 0.0004427343
        %v1437 = vsel %vm1436, %v1434, %v1431
        %v1438 = vadd.f32 %v1296, 1.0
        %v1439 = vlog2.pop %v1438
        %v1440 = vmul.f32 %v1439, 0.6931472
        %v1441 = vmul.f32 -0.5, %v1296
        %v1442 = vadd.f32 %v1441, 1.0
        %v1443 = vmul.f32 %v1442, %v1296
        %v1444 = vand.u32 2147483647, %v1296
        %vm1445 = vcmp.lt.f32.partialorder %v1444, 0.0004427343
        %v1446 = vsel %vm1445, %v1443, %v1440
        %v1447 = vadd.f32 %v1308, 1.0
        %v1448 = vlog2.pop %v1447
        %v1449 = vmul.f32 %v1448, 0.6931472
        %v1450 = vmul.f32 -0.5, %v1308
        %v1451 = vadd.f32 %v1450, 1.0
        %v1452 = vmul.f32 %v1451, %v1308
        %v1453 = vand.u32 2147483647, %v1308
        %vm1454 = vcmp.lt.f32.partialorder %v1453, 0.0004427343
        %v1455 = vsel %vm1454, %v1452, %v1449
        %v1456 = vadd.f32 %v1320, 1.0
        %v1457 = vlog2.pop %v1456
        %v1458 = vmul.f32 %v1457, 0.6931472
        %v1459 = vmul.f32 -0.5, %v1320
        %v1460 = vadd.f32 %v1459, 1.0
        %v1461 = vmul.f32 %v1460, %v1320
        %v1462 = vand.u32 2147483647, %v1320
        %vm1463 = vcmp.lt.f32.partialorder %v1462, 0.0004427343
        %v1464 = vsel %vm1463, %v1461, %v1458
        %1465 = vst [vmem:[%s333] sm:$0xff] %v1329
        %1466 = vst [vmem:[%s333 + $0x8] sm:$0xff] %v1338
        %1467 = vst [vmem:[%s333 + $0x10] sm:$0xff] %v1347
        %1468 = vst [vmem:[%s333 + $0x18] sm:$0xff] %v1356
        %1469 = vst [vmem:[%s333 + $0x20] sm:$0xff] %v1365
        %1470 = vst [vmem:[%s333 + $0x28] sm:$0xff] %v1374
        %1471 = vst [vmem:[%s333 + $0x30] sm:$0xff] %v1383
        %1472 = vst [vmem:[%s333 + $0x38] sm:$0xff] %v1392
        %1473 = vst [vmem:[%s333 + $0x40] sm:$0xff] %v1401
        %1474 = vst [vmem:[%s333 + $0x48] sm:$0xff] %v1410
        %1475 = vst [vmem:[%s333 + $0x50] sm:$0xff] %v1419
        %1476 = vst [vmem:[%s333 + $0x58] sm:$0xff] %v1428
        %1477 = vst [vmem:[%s333 + $0x60] sm:$0xff] %v1437
        %1478 = vst [vmem:[%s333 + $0x68] sm:$0xff] %v1446
        %1479 = vst [vmem:[%s333 + $0x70] sm:$0xff] %v1455
        %1480 = vst [vmem:[%s333 + $0x78] sm:$0xff] %v1464
        %s1481 = sand.u32 %s178, 1
        %s1482 = scalar_lea.sflag [#allocation4], %s1481
        %s1483 = sand.u32 %s178, 1
        %s1484 = smul.addr %s1483, 128
        %s1485 = scalar_lea.vmem [#allocation7], %s1484
        // Predicated region
        $region53: #{_augment_device.1} parent=43 // pred_check
          %p1486 = pneg %p188
        $region54: #{_augment_device.1} parent=43 // pred_check_branch
          %1488 = sbr.rel (%p1486) target = $region56
        $region55: #{_augment_device.1} parent=43 // pred_region
          %1490 = vsyncadd %s1482, 0
          %s1491 = smul.addr %s24, 16
          %s1492 = smul.addr %s1491, 8
          %s1493 = scalar_lea.hbm %s6, %s1492
          %s1494 = sshll.u32 %s1485, 4
          %s1495 = int_to_ptr.vmem [resolvable:$true] %s1494
          %s1496 = sshll.u32 %s1493, 4
          %s1497 = int_to_ptr.hbm [resolvable:$true] %s1496
          %1502 = dma.vmem_to_hbm [thread:$0]  %s1495, 2048, %s1497, %s1482, 128, 128, 8
        $region56: #{_augment_device.1} parent=43 // pred_fallthru
          _
      $region44: #{_augment_device.1} parent=5 // pred_fallthru
        _
      %p1503 = scmp.le.s32.totalorder 2, %s19
      // Predicated region
      $region57: #{_augment_device.1} parent=5 // pred_check
        %p1504 = pneg %p1503
      $region58: #{_augment_device.1} parent=5 // pred_check_branch
        %1506 = sbr.rel (%p1504) target = $region60
      $region59: #{_augment_device.1} parent=5 // pred_region
        %s1507 = ssub.s32 %s19, 2
        // Predicated region
        $region61: #{_augment_device.1} parent=59 // pred_check
          %p1508 = pneg %p194
        $region62: #{_augment_device.1} parent=59 // pred_check_branch
          %1510 = sbr.rel (%p1508) target = $region64
        $region63: #{_augment_device.1} parent=59 // pred_region
          %s1511 = sand.u32 %s179, 1
          %s1512 = scalar_lea.sflag [#allocation4], %s1511
          %s1513 = sand.u32 %s179, 1
          %s1514 = smul.addr %s1513, 128
          %s1515 = scalar_lea.vmem [#allocation7], %s1514
          %1517 = dma.done %s1512, 2048
        $region64: #{_augment_device.1} parent=59 // pred_fallthru
          _
      $region60: #{_augment_device.1} parent=5 // pred_fallthru
        _
    $region6: #{_augment_device.1} parent=1 // loop_footer
      %s23 = sadd.s32 1, %s19
    $region7: #{_augment_device.1} parent=1 // loop_footer_branch
      %18 = sbr.rel target = $region3
    $region8: #{_augment_device.1} parent=1 // loop_exit
      _
    %1518 = vsyncpa [#allocation3], 1
    %s1519 = scalar_lea.sflag [#allocation3], 1
    %1520 = vsyncpa %s1519, 1
    %1521 = vsyncpa [#allocation6], 1
    %1522 = vsyncpa [#allocation4], 1
    %s1523 = scalar_lea.sflag [#allocation4], 1
    %1524 = vsyncpa %s1523, 1

</llo_original>
